<compile_context>
chip_gen: v6e
topology: v6e:2x2x1
jax: 0.10.0
libtpu: 0.0.40
codegen_flags: <defaults>
</compile_context>

<pallas_src>
import functools

import numpy as np
import jax
import jax.numpy as jnp
from jax.experimental import pallas as pl
from jax.experimental.pallas import tpu as pltpu


def _round_up(x, m):
    return (x + m - 1) // m * m


# ---------------------------------------------------------------------------
# Fused kernel: 2x2 maxpool + (3x3 valid conv + folded BN + ReLU) x 2.
# ---------------------------------------------------------------------------
def _downsample_convbn_kernel(x_ref, w1_ref, b1_ref, w2_ref, b2_ref, o_ref,
                              xp_ref, y1_ref, *, wp, r1, r2):
    # x_ref : (4, rows_in, Cp)  -- the 4 taps of every 2x2 pool window; rows
    #                              are the pooled image flattened as i*Wp + j,
    #                              followed by a zero tail (for slice bounds).
    # w1_ref: (9, Cp,  Chp)  b1_ref: (1, Chp)   (BN1 scale pre-folded)
    # w2_ref: (9, Chp, Cop)  b2_ref: (1, Cop)   (BN2 scale pre-folded)
    # o_ref : (r2, Cop)      r2 = H2*Wp; columns j >= W2 of a row are junk.
    # xp_ref: (rows_in, Cp)  VMEM scratch: pooled image.
    # y1_ref: (r1, Chp)      VMEM scratch: conv1+BN1+ReLU output (wide rows).

    # 2x2 max pool: elementwise max of the four taps (pure VPU work).
    xp_ref[...] = jnp.maximum(jnp.maximum(x_ref[0], x_ref[1]),
                              jnp.maximum(x_ref[2], x_ref[3]))

    # conv1 (3x3 valid): 9 wide matmuls accumulated in f32.
    chp = w1_ref.shape[2]
    acc1 = jnp.zeros((r1, chp), jnp.float32)
    for di in range(3):
        for dj in range(3):
            acc1 = acc1 + jnp.dot(
                xp_ref[pl.ds(di * wp + dj, r1), :],
                w1_ref[di * 3 + dj],
                preferred_element_type=jnp.float32)
    y1_ref[...] = jnp.maximum(acc1 + b1_ref[...], 0.0)    # folded BN1 + ReLU

    # conv2 (3x3 valid): 9 wide matmuls accumulated in f32.
    cop = w2_ref.shape[2]
    acc2 = jnp.zeros((r2, cop), jnp.float32)
    for di in range(3):
        for dj in range(3):
            acc2 = acc2 + jnp.dot(
                y1_ref[pl.ds(di * wp + dj, r2), :],
                w2_ref[di * 3 + dj],
                preferred_element_type=jnp.float32)
    o_ref[...] = jnp.maximum(acc2 + b2_ref[...], 0.0)      # folded BN2 + ReLU


# ---------------------------------------------------------------------------
# Wrapper: layout plumbing (NCHW <-> packed kernel layout) + pallas_call.
# ---------------------------------------------------------------------------
def downsample_forward(params, x_nchw):
    w1, b1, w2, b2 = params["w1"], params["b1"], params["w2"], params["b2"]
    cout = params["cout"]
    n, c, h, w = x_nchw.shape
    assert h % 2 == 0 and w % 2 == 0
    cp, chp = w1.shape[1], w1.shape[2]
    cop = w2.shape[2]

    hp, wp = h // 2, w // 2              # after 2x2 max pool
    h1 = hp - 2                          # after conv1 (valid 3x3)
    h2, w2o = h1 - 2, (wp - 2) - 2       # after conv2 (valid 3x3)

    pad1 = 8                             # extra junk rows carried past conv1
    r1 = h1 * wp + pad1                  # conv1 output rows (wide-row layout)
    r2 = h2 * wp                         # conv2 output rows (wide-row layout)
    tail = _round_up(pad1 + 2, 8)        # zero tail keeps conv1 slices in-bounds
    rows_in = hp * wp + tail

    # NCHW -> (N, 4 pool taps, Hp*Wp rows, Cp channels), zero-padded.
    # This single transpose replaces the NCHW->NHWC transpose we would need
    # anyway and makes the in-kernel pool a plain elementwise max.
    x = x_nchw.reshape(n, c, hp, 2, wp, 2)
    x = jnp.transpose(x, (0, 3, 5, 2, 4, 1))          # (N, di, dj, Hp, Wp, C)
    x = x.reshape(n, 4, hp * wp, c)
    x = jnp.pad(x, ((0, 0), (0, 0), (0, tail), (0, cp - c)))

    kernel = functools.partial(_downsample_convbn_kernel, wp=wp, r1=r1, r2=r2)
    out = pl.pallas_call(
        kernel,
        out_shape=jax.ShapeDtypeStruct((n, r2, cop), jnp.float32),
        grid=(n,),
        in_specs=[
            pl.BlockSpec((None, 4, rows_in, cp), lambda i: (i, 0, 0, 0)),
            pl.BlockSpec((9, cp, chp), lambda i: (0, 0, 0)),
            pl.BlockSpec((1, chp), lambda i: (0, 0)),
            pl.BlockSpec((9, chp, cop), lambda i: (0, 0, 0)),
            pl.BlockSpec((1, cop), lambda i: (0, 0)),
        ],
        out_specs=pl.BlockSpec((None, r2, cop), lambda i: (i, 0, 0)),
        scratch_shapes=[
            pltpu.VMEM((rows_in, cp), jnp.float32),   # pooled image
            pltpu.VMEM((r1, chp), jnp.float32),       # conv1 output
        ],
        compiler_params=pltpu.CompilerParams(
            dimension_semantics=("parallel",)),
    )(x, w1, b1, w2, b2)

    # (N, H2*Wp, Cop) -> valid (N, Cout, H2, W2) in NCHW.
    out = out.reshape(n, h2, wp, cop)[:, :, :w2o, :cout]
    return jnp.transpose(out, (0, 3, 1, 2))


# ---------------------------------------------------------------------------
# Deterministic synthetic parameters, pre-folded + packed for the kernel
# (raw copies kept for the pure-JAX reference check).
# ---------------------------------------------------------------------------
def init_params(key, in_channel, out_channel):
    hidden = out_channel                       # Conv_BN default hidden_dim
    keys = jax.random.split(key, 10)

    def conv_w(k, cin, co):
        w = jax.random.normal(k, (co, cin, 3, 3), jnp.float32)
        return w / np.sqrt(cin * 9)

    def bn_fold(kg, kb, km, kv, ch, eps=1e-5):
        gamma = 1.0 + 0.1 * jax.random.normal(kg, (ch,), jnp.float32)
        beta = 0.1 * jax.random.normal(kb, (ch,), jnp.float32)
        mean = 0.1 * jax.random.normal(km, (ch,), jnp.float32)
        var = jnp.abs(jax.random.normal(kv, (ch,), jnp.float32)) + 0.5
        scale = gamma / jnp.sqrt(var + eps)
        bias = beta - mean * scale
        return scale, bias

    cp = _round_up(in_channel, 128)
    chp = _round_up(hidden, 128)
    cop = _round_up(out_channel, 128)

    def pack(w_oihw, scale, bias, cin, co, cin_p, co_p):
        # Fold BN scale into the conv weight; layout (9, cin_p, co_p).
        wf = w_oihw * scale[:, None, None, None]
        wf = jnp.transpose(wf, (2, 3, 1, 0)).reshape(9, cin, co)
        wf = jnp.pad(wf, ((0, 0), (0, cin_p - cin), (0, co_p - co)))
        bp = jnp.pad(bias, (0, co_p - co)).reshape(1, co_p)
        return wf, bp

    w1_raw = conv_w(keys[0], in_channel, hidden)
    s1, b1_raw = bn_fold(keys[1], keys[2], keys[3], keys[4], hidden)
    w2_raw = conv_w(keys[5], hidden, out_channel)
    s2, b2_raw = bn_fold(keys[6], keys[7], keys[8], keys[9], out_channel)

    w1p, b1p = pack(w1_raw, s1, b1_raw, in_channel, hidden, cp, chp)
    w2p, b2p = pack(w2_raw, s2, b2_raw, hidden, out_channel, chp, cop)
    return dict(w1=w1p, b1=b1p, w2=w2p, b2=b2p, cout=out_channel,
                ref=dict(w1=w1_raw, s1=s1, b1=b1_raw,
                         w2=w2_raw, s2=s2, b2=b2_raw))


def downsample_reference(params, x):
    """Pure-JAX reference: maxpool(2) + (conv3x3 valid + BN(eval) + ReLU) x2."""
    ref = params["ref"]
    x = jax.lax.reduce_window(
        x, jnp.array(-jnp.inf, x.dtype), jax.lax.max,
        (1, 1, 2, 2), (1, 1, 2, 2), "VALID")

    def conv_bn_relu(y, wgt, s, b):
        y = jax.lax.conv_general_dilated(
            y, wgt, window_strides=(1, 1), padding="VALID",
            dimension_numbers=("NCHW", "OIHW", "NCHW"),
            precision=jax.lax.Precision.HIGHEST)
        y = y * s[None, :, None, None] + b[None, :, None, None]
        return jnp.maximum(y, 0.0)

    x = conv_bn_relu(x, ref["w1"], ref["s1"], ref["b1"])
    return conv_bn_relu(x, ref["w2"], ref["s2"], ref["b2"])


if __name__ == "__main__":
    key = jax.random.PRNGKey(0)
    kx, kp = jax.random.split(key)

    N, C, H, W = 2, 4, 16, 16
    out_channel = 4

    x = jax.random.normal(kx, (N, C, H, W), jnp.float32)
    params = init_params(kp, C, out_channel)

    fwd = jax.jit(functools.partial(downsample_forward, params))
    out = fwd(x)
    jax.block_until_ready(out)

    # maxpool halves H, W; the two valid 3x3 convs shrink each dim by 4.
    assert out.shape == (N, out_channel, H // 2 - 4, W // 2 - 4), out.shape
    assert bool(jnp.all(jnp.isfinite(out)))

    ref_out = downsample_reference(params, x)
    assert bool(jnp.allclose(out, ref_out, atol=1e-2, rtol=1e-2)), (
        float(jnp.max(jnp.abs(out - ref_out))))
    print("KERNEL_OK")
</pallas_src>

<mosaic_0001>
module attributes {stable_mosaic.version = 11 : i64} {
  func.func @_downsample_convbn_kernel(%arg0: i32, %arg1: memref<1x4x80x128xf32, #tpu.memory_space<vmem>>, %arg2: memref<9x128x128xf32, #tpu.memory_space<vmem>>, %arg3: memref<1x128xf32, #tpu.memory_space<vmem>>, %arg4: memref<9x128x128xf32, #tpu.memory_space<vmem>>, %arg5: memref<1x128xf32, #tpu.memory_space<vmem>>, %arg6: memref<1x32x128xf32, #tpu.memory_space<vmem>>, %arg7: memref<80x128xf32, #tpu.memory_space<vmem>>, %arg8: memref<56x128xf32, #tpu.memory_space<vmem>>) attributes {dimension_semantics = [#tpu.dimension_semantics<parallel>], iteration_bounds = array<i64: 2>, scalar_prefetch = 0 : i64, scratch_operands = 2 : i64, tpu.core_type = #tpu.core_type<tc>, window_params = [{transform_indices = @transform_0, window_bounds = array<i64: 1, 4, 80, 128>}, {pipeline_mode = #tpu.pipeline_mode<synchronous>, transform_indices = @transform_1, window_bounds = array<i64: 9, 128, 128>}, {pipeline_mode = #tpu.pipeline_mode<synchronous>, transform_indices = @transform_2, window_bounds = array<i64: 1, 128>}, {pipeline_mode = #tpu.pipeline_mode<synchronous>, transform_indices = @transform_3, window_bounds = array<i64: 9, 128, 128>}, {pipeline_mode = #tpu.pipeline_mode<synchronous>, transform_indices = @transform_4, window_bounds = array<i64: 1, 128>}, {transform_indices = @transform_5, window_bounds = array<i64: 1, 32, 128>}]} {
    %c0 = arith.constant 0 : index
    %c0_0 = arith.constant 0 : index
    %c0_1 = arith.constant 0 : index
    %c0_2 = arith.constant 0 : index
    %0 = vector.load %arg1[%c0, %c0_0, %c0_1, %c0_2] : memref<1x4x80x128xf32, #tpu.memory_space<vmem>>, vector<1x1x80x128xf32>
    %1 = vector.shape_cast %0 : vector<1x1x80x128xf32> to vector<80x128xf32>
    %c0_3 = arith.constant 0 : index
    %c1 = arith.constant 1 : index
    %c0_4 = arith.constant 0 : index
    %c0_5 = arith.constant 0 : index
    %2 = vector.load %arg1[%c0_3, %c1, %c0_4, %c0_5] : memref<1x4x80x128xf32, #tpu.memory_space<vmem>>, vector<1x1x80x128xf32>
    %3 = vector.shape_cast %2 : vector<1x1x80x128xf32> to vector<80x128xf32>
    %4 = arith.maximumf %1, %3 : vector<80x128xf32>
    %c0_6 = arith.constant 0 : index
    %c2 = arith.constant 2 : index
    %c0_7 = arith.constant 0 : index
    %c0_8 = arith.constant 0 : index
    %5 = vector.load %arg1[%c0_6, %c2, %c0_7, %c0_8] : memref<1x4x80x128xf32, #tpu.memory_space<vmem>>, vector<1x1x80x128xf32>
    %6 = vector.shape_cast %5 : vector<1x1x80x128xf32> to vector<80x128xf32>
    %c0_9 = arith.constant 0 : index
    %c3 = arith.constant 3 : index
    %c0_10 = arith.constant 0 : index
    %c0_11 = arith.constant 0 : index
    %7 = vector.load %arg1[%c0_9, %c3, %c0_10, %c0_11] : memref<1x4x80x128xf32, #tpu.memory_space<vmem>>, vector<1x1x80x128xf32>
    %8 = vector.shape_cast %7 : vector<1x1x80x128xf32> to vector<80x128xf32>
    %9 = arith.maximumf %6, %8 : vector<80x128xf32>
    %10 = arith.maximumf %4, %9 : vector<80x128xf32>
    %c0_12 = arith.constant 0 : index
    %c0_13 = arith.constant 0 : index
    %11 = vector.load %arg7[%c0_12, %c0_13] : memref<80x128xf32, #tpu.memory_space<vmem>>, vector<80x128xf32>
    tpu.vector_store %arg7[%c0_12, %c0_13], %10 {strides = array<i32>} : memref<80x128xf32, #tpu.memory_space<vmem>>, vector<80x128xf32>,
    %cst = arith.constant 0.000000e+00 : f32
    %12 = vector.broadcast %cst : f32 to vector<56x128xf32>
    %c0_14 = arith.constant 0 : index
    %c0_15 = arith.constant 0 : index
    %13 = vector.load %arg7[%c0_14, %c0_15] : memref<80x128xf32, #tpu.memory_space<vmem>>, vector<56x128xf32>
    %c0_16 = arith.constant 0 : index
    %c0_17 = arith.constant 0 : index
    %c0_18 = arith.constant 0 : index
    %14 = vector.load %arg2[%c0_16, %c0_17, %c0_18] : memref<9x128x128xf32, #tpu.memory_space<vmem>>, vector<1x128x128xf32>
    %15 = vector.shape_cast %14 : vector<1x128x128xf32> to vector<128x128xf32>
    %cst_19 = arith.constant dense<0.000000e+00> : vector<56x128xf32>
    %16 = tpu.matmul %13, %15, %cst_19 {dimension_numbers = #tpu.dot_dimension_numbers<[1], [0], [0], [1], [0, 0, 1, 1], [], []>} : vector<56x128xf32>, vector<128x128xf32>, vector<56x128xf32> -> vector<56x128xf32>
    %17 = arith.addf %12, %16 : vector<56x128xf32>
    %c1_20 = arith.constant 1 : index
    %c0_21 = arith.constant 0 : index
    %18 = vector.load %arg7[%c1_20, %c0_21] : memref<80x128xf32, #tpu.memory_space<vmem>>, vector<56x128xf32>
    %c1_22 = arith.constant 1 : index
    %c0_23 = arith.constant 0 : index
    %c0_24 = arith.constant 0 : index
    %19 = vector.load %arg2[%c1_22, %c0_23, %c0_24] : memref<9x128x128xf32, #tpu.memory_space<vmem>>, vector<1x128x128xf32>
    %20 = vector.shape_cast %19 : vector<1x128x128xf32> to vector<128x128xf32>
    %cst_25 = arith.constant dense<0.000000e+00> : vector<56x128xf32>
    %21 = tpu.matmul %18, %20, %cst_25 {dimension_numbers = #tpu.dot_dimension_numbers<[1], [0], [0], [1], [0, 0, 1, 1], [], []>} : vector<56x128xf32>, vector<128x128xf32>, vector<56x128xf32> -> vector<56x128xf32>
    %22 = arith.addf %17, %21 : vector<56x128xf32>
    %c2_26 = arith.constant 2 : index
    %c0_27 = arith.constant 0 : index
    %23 = vector.load %arg7[%c2_26, %c0_27] : memref<80x128xf32, #tpu.memory_space<vmem>>, vector<56x128xf32>
    %c2_28 = arith.constant 2 : index
    %c0_29 = arith.constant 0 : index
    %c0_30 = arith.constant 0 : index
    %24 = vector.load %arg2[%c2_28, %c0_29, %c0_30] : memref<9x128x128xf32, #tpu.memory_space<vmem>>, vector<1x128x128xf32>
    %25 = vector.shape_cast %24 : vector<1x128x128xf32> to vector<128x128xf32>
    %cst_31 = arith.constant dense<0.000000e+00> : vector<56x128xf32>
    %26 = tpu.matmul %23, %25, %cst_31 {dimension_numbers = #tpu.dot_dimension_numbers<[1], [0], [0], [1], [0, 0, 1, 1], [], []>} : vector<56x128xf32>, vector<128x128xf32>, vector<56x128xf32> -> vector<56x128xf32>
    %27 = arith.addf %22, %26 : vector<56x128xf32>
    %c8 = arith.constant 8 : index
    %c0_32 = arith.constant 0 : index
    %28 = vector.load %arg7[%c8, %c0_32] : memref<80x128xf32, #tpu.memory_space<vmem>>, vector<56x128xf32>
    %c3_33 = arith.constant 3 : index
    %c0_34 = arith.constant 0 : index
    %c0_35 = arith.constant 0 : index
    %29 = vector.load %arg2[%c3_33, %c0_34, %c0_35] : memref<9x128x128xf32, #tpu.memory_space<vmem>>, vector<1x128x128xf32>
    %30 = vector.shape_cast %29 : vector<1x128x128xf32> to vector<128x128xf32>
    %cst_36 = arith.constant dense<0.000000e+00> : vector<56x128xf32>
    %31 = tpu.matmul %28, %30, %cst_36 {dimension_numbers = #tpu.dot_dimension_numbers<[1], [0], [0], [1], [0, 0, 1, 1], [], []>} : vector<56x128xf32>, vector<128x128xf32>, vector<56x128xf32> -> vector<56x128xf32>
    %32 = arith.addf %27, %31 : vector<56x128xf32>
    %c9 = arith.constant 9 : index
    %c0_37 = arith.constant 0 : index
    %33 = vector.load %arg7[%c9, %c0_37] : memref<80x128xf32, #tpu.memory_space<vmem>>, vector<56x128xf32>
    %c4 = arith.constant 4 : index
    %c0_38 = arith.constant 0 : index
    %c0_39 = arith.constant 0 : index
    %34 = vector.load %arg2[%c4, %c0_38, %c0_39] : memref<9x128x128xf32, #tpu.memory_space<vmem>>, vector<1x128x128xf32>
    %35 = vector.shape_cast %34 : vector<1x128x128xf32> to vector<128x128xf32>
    %cst_40 = arith.constant dense<0.000000e+00> : vector<56x128xf32>
    %36 = tpu.matmul %33, %35, %cst_40 {dimension_numbers = #tpu.dot_dimension_numbers<[1], [0], [0], [1], [0, 0, 1, 1], [], []>} : vector<56x128xf32>, vector<128x128xf32>, vector<56x128xf32> -> vector<56x128xf32>
    %37 = arith.addf %32, %36 : vector<56x128xf32>
    %c10 = arith.constant 10 : index
    %c0_41 = arith.constant 0 : index
    %38 = vector.load %arg7[%c10, %c0_41] : memref<80x128xf32, #tpu.memory_space<vmem>>, vector<56x128xf32>
    %c5 = arith.constant 5 : index
    %c0_42 = arith.constant 0 : index
    %c0_43 = arith.constant 0 : index
    %39 = vector.load %arg2[%c5, %c0_42, %c0_43] : memref<9x128x128xf32, #tpu.memory_space<vmem>>, vector<1x128x128xf32>
    %40 = vector.shape_cast %39 : vector<1x128x128xf32> to vector<128x128xf32>
    %cst_44 = arith.constant dense<0.000000e+00> : vector<56x128xf32>
    %41 = tpu.matmul %38, %40, %cst_44 {dimension_numbers = #tpu.dot_dimension_numbers<[1], [0], [0], [1], [0, 0, 1, 1], [], []>} : vector<56x128xf32>, vector<128x128xf32>, vector<56x128xf32> -> vector<56x128xf32>
    %42 = arith.addf %37, %41 : vector<56x128xf32>
    %c16 = arith.constant 16 : index
    %c0_45 = arith.constant 0 : index
    %43 = vector.load %arg7[%c16, %c0_45] : memref<80x128xf32, #tpu.memory_space<vmem>>, vector<56x128xf32>
    %c6 = arith.constant 6 : index
    %c0_46 = arith.constant 0 : index
    %c0_47 = arith.constant 0 : index
    %44 = vector.load %arg2[%c6, %c0_46, %c0_47] : memref<9x128x128xf32, #tpu.memory_space<vmem>>, vector<1x128x128xf32>
    %45 = vector.shape_cast %44 : vector<1x128x128xf32> to vector<128x128xf32>
    %cst_48 = arith.constant dense<0.000000e+00> : vector<56x128xf32>
    %46 = tpu.matmul %43, %45, %cst_48 {dimension_numbers = #tpu.dot_dimension_numbers<[1], [0], [0], [1], [0, 0, 1, 1], [], []>} : vector<56x128xf32>, vector<128x128xf32>, vector<56x128xf32> -> vector<56x128xf32>
    %47 = arith.addf %42, %46 : vector<56x128xf32>
    %c17 = arith.constant 17 : index
    %c0_49 = arith.constant 0 : index
    %48 = vector.load %arg7[%c17, %c0_49] : memref<80x128xf32, #tpu.memory_space<vmem>>, vector<56x128xf32>
    %c7 = arith.constant 7 : index
    %c0_50 = arith.constant 0 : index
    %c0_51 = arith.constant 0 : index
    %49 = vector.load %arg2[%c7, %c0_50, %c0_51] : memref<9x128x128xf32, #tpu.memory_space<vmem>>, vector<1x128x128xf32>
    %50 = vector.shape_cast %49 : vector<1x128x128xf32> to vector<128x128xf32>
    %cst_52 = arith.constant dense<0.000000e+00> : vector<56x128xf32>
    %51 = tpu.matmul %48, %50, %cst_52 {dimension_numbers = #tpu.dot_dimension_numbers<[1], [0], [0], [1], [0, 0, 1, 1], [], []>} : vector<56x128xf32>, vector<128x128xf32>, vector<56x128xf32> -> vector<56x128xf32>
    %52 = arith.addf %47, %51 : vector<56x128xf32>
    %c18 = arith.constant 18 : index
    %c0_53 = arith.constant 0 : index
    %53 = vector.load %arg7[%c18, %c0_53] : memref<80x128xf32, #tpu.memory_space<vmem>>, vector<56x128xf32>
    %c8_54 = arith.constant 8 : index
    %c0_55 = arith.constant 0 : index
    %c0_56 = arith.constant 0 : index
    %54 = vector.load %arg2[%c8_54, %c0_55, %c0_56] : memref<9x128x128xf32, #tpu.memory_space<vmem>>, vector<1x128x128xf32>
    %55 = vector.shape_cast %54 : vector<1x128x128xf32> to vector<128x128xf32>
    %cst_57 = arith.constant dense<0.000000e+00> : vector<56x128xf32>
    %56 = tpu.matmul %53, %55, %cst_57 {dimension_numbers = #tpu.dot_dimension_numbers<[1], [0], [0], [1], [0, 0, 1, 1], [], []>} : vector<56x128xf32>, vector<128x128xf32>, vector<56x128xf32> -> vector<56x128xf32>
    %57 = arith.addf %52, %56 : vector<56x128xf32>
    %c0_58 = arith.constant 0 : index
    %c0_59 = arith.constant 0 : index
    %58 = vector.load %arg3[%c0_58, %c0_59] : memref<1x128xf32, #tpu.memory_space<vmem>>, vector<1x128xf32>
    %59 = vector.broadcast %58 : vector<1x128xf32> to vector<56x128xf32>
    %60 = arith.addf %57, %59 : vector<56x128xf32>
    %cst_60 = arith.constant 0.000000e+00 : f32
    %61 = vector.broadcast %cst_60 : f32 to vector<56x128xf32>
    %62 = arith.maximumf %60, %61 : vector<56x128xf32>
    %c0_61 = arith.constant 0 : index
    %c0_62 = arith.constant 0 : index
    %63 = vector.load %arg8[%c0_61, %c0_62] : memref<56x128xf32, #tpu.memory_space<vmem>>, vector<56x128xf32>
    tpu.vector_store %arg8[%c0_61, %c0_62], %62 {strides = array<i32>} : memref<56x128xf32, #tpu.memory_space<vmem>>, vector<56x128xf32>,
    %cst_63 = arith.constant 0.000000e+00 : f32
    %64 = vector.broadcast %cst_63 : f32 to vector<32x128xf32>
    %c0_64 = arith.constant 0 : index
    %c0_65 = arith.constant 0 : index
    %65 = vector.load %arg8[%c0_64, %c0_65] : memref<56x128xf32, #tpu.memory_space<vmem>>, vector<32x128xf32>
    %c0_66 = arith.constant 0 : index
    %c0_67 = arith.constant 0 : index
    %c0_68 = arith.constant 0 : index
    %66 = vector.load %arg4[%c0_66, %c0_67, %c0_68] : memref<9x128x128xf32, #tpu.memory_space<vmem>>, vector<1x128x128xf32>
    %67 = vector.shape_cast %66 : vector<1x128x128xf32> to vector<128x128xf32>
    %cst_69 = arith.constant dense<0.000000e+00> : vector<32x128xf32>
    %68 = tpu.matmul %65, %67, %cst_69 {dimension_numbers = #tpu.dot_dimension_numbers<[1], [0], [0], [1], [0, 0, 1, 1], [], []>} : vector<32x128xf32>, vector<128x128xf32>, vector<32x128xf32> -> vector<32x128xf32>
    %69 = arith.addf %64, %68 : vector<32x128xf32>
    %c1_70 = arith.constant 1 : index
    %c0_71 = arith.constant 0 : index
    %70 = vector.load %arg8[%c1_70, %c0_71] : memref<56x128xf32, #tpu.memory_space<vmem>>, vector<32x128xf32>
    %c1_72 = arith.constant 1 : index
    %c0_73 = arith.constant 0 : index
    %c0_74 = arith.constant 0 : index
    %71 = vector.load %arg4[%c1_72, %c0_73, %c0_74] : memref<9x128x128xf32, #tpu.memory_space<vmem>>, vector<1x128x128xf32>
    %72 = vector.shape_cast %71 : vector<1x128x128xf32> to vector<128x128xf32>
    %cst_75 = arith.constant dense<0.000000e+00> : vector<32x128xf32>
    %73 = tpu.matmul %70, %72, %cst_75 {dimension_numbers = #tpu.dot_dimension_numbers<[1], [0], [0], [1], [0, 0, 1, 1], [], []>} : vector<32x128xf32>, vector<128x128xf32>, vector<32x128xf32> -> vector<32x128xf32>
    %74 = arith.addf %69, %73 : vector<32x128xf32>
    %c2_76 = arith.constant 2 : index
    %c0_77 = arith.constant 0 : index
    %75 = vector.load %arg8[%c2_76, %c0_77] : memref<56x128xf32, #tpu.memory_space<vmem>>, vector<32x128xf32>
    %c2_78 = arith.constant 2 : index
    %c0_79 = arith.constant 0 : index
    %c0_80 = arith.constant 0 : index
    %76 = vector.load %arg4[%c2_78, %c0_79, %c0_80] : memref<9x128x128xf32, #tpu.memory_space<vmem>>, vector<1x128x128xf32>
    %77 = vector.shape_cast %76 : vector<1x128x128xf32> to vector<128x128xf32>
    %cst_81 = arith.constant dense<0.000000e+00> : vector<32x128xf32>
    %78 = tpu.matmul %75, %77, %cst_81 {dimension_numbers = #tpu.dot_dimension_numbers<[1], [0], [0], [1], [0, 0, 1, 1], [], []>} : vector<32x128xf32>, vector<128x128xf32>, vector<32x128xf32> -> vector<32x128xf32>
    %79 = arith.addf %74, %78 : vector<32x128xf32>
    %c8_82 = arith.constant 8 : index
    %c0_83 = arith.constant 0 : index
    %80 = vector.load %arg8[%c8_82, %c0_83] : memref<56x128xf32, #tpu.memory_space<vmem>>, vector<32x128xf32>
    %c3_84 = arith.constant 3 : index
    %c0_85 = arith.constant 0 : index
    %c0_86 = arith.constant 0 : index
    %81 = vector.load %arg4[%c3_84, %c0_85, %c0_86] : memref<9x128x128xf32, #tpu.memory_space<vmem>>, vector<1x128x128xf32>
    %82 = vector.shape_cast %81 : vector<1x128x128xf32> to vector<128x128xf32>
    %cst_87 = arith.constant dense<0.000000e+00> : vector<32x128xf32>
    %83 = tpu.matmul %80, %82, %cst_87 {dimension_numbers = #tpu.dot_dimension_numbers<[1], [0], [0], [1], [0, 0, 1, 1], [], []>} : vector<32x128xf32>, vector<128x128xf32>, vector<32x128xf32> -> vector<32x128xf32>
    %84 = arith.addf %79, %83 : vector<32x128xf32>
    %c9_88 = arith.constant 9 : index
    %c0_89 = arith.constant 0 : index
    %85 = vector.load %arg8[%c9_88, %c0_89] : memref<56x128xf32, #tpu.memory_space<vmem>>, vector<32x128xf32>
    %c4_90 = arith.constant 4 : index
    %c0_91 = arith.constant 0 : index
    %c0_92 = arith.constant 0 : index
    %86 = vector.load %arg4[%c4_90, %c0_91, %c0_92] : memref<9x128x128xf32, #tpu.memory_space<vmem>>, vector<1x128x128xf32>
    %87 = vector.shape_cast %86 : vector<1x128x128xf32> to vector<128x128xf32>
    %cst_93 = arith.constant dense<0.000000e+00> : vector<32x128xf32>
    %88 = tpu.matmul %85, %87, %cst_93 {dimension_numbers = #tpu.dot_dimension_numbers<[1], [0], [0], [1], [0, 0, 1, 1], [], []>} : vector<32x128xf32>, vector<128x128xf32>, vector<32x128xf32> -> vector<32x128xf32>
    %89 = arith.addf %84, %88 : vector<32x128xf32>
    %c10_94 = arith.constant 10 : index
    %c0_95 = arith.constant 0 : index
    %90 = vector.load %arg8[%c10_94, %c0_95] : memref<56x128xf32, #tpu.memory_space<vmem>>, vector<32x128xf32>
    %c5_96 = arith.constant 5 : index
    %c0_97 = arith.constant 0 : index
    %c0_98 = arith.constant 0 : index
    %91 = vector.load %arg4[%c5_96, %c0_97, %c0_98] : memref<9x128x128xf32, #tpu.memory_space<vmem>>, vector<1x128x128xf32>
    %92 = vector.shape_cast %91 : vector<1x128x128xf32> to vector<128x128xf32>
    %cst_99 = arith.constant dense<0.000000e+00> : vector<32x128xf32>
    %93 = tpu.matmul %90, %92, %cst_99 {dimension_numbers = #tpu.dot_dimension_numbers<[1], [0], [0], [1], [0, 0, 1, 1], [], []>} : vector<32x128xf32>, vector<128x128xf32>, vector<32x128xf32> -> vector<32x128xf32>
    %94 = arith.addf %89, %93 : vector<32x128xf32>
    %c16_100 = arith.constant 16 : index
    %c0_101 = arith.constant 0 : index
    %95 = vector.load %arg8[%c16_100, %c0_101] : memref<56x128xf32, #tpu.memory_space<vmem>>, vector<32x128xf32>
    %c6_102 = arith.constant 6 : index
    %c0_103 = arith.constant 0 : index
    %c0_104 = arith.constant 0 : index
    %96 = vector.load %arg4[%c6_102, %c0_103, %c0_104] : memref<9x128x128xf32, #tpu.memory_space<vmem>>, vector<1x128x128xf32>
    %97 = vector.shape_cast %96 : vector<1x128x128xf32> to vector<128x128xf32>
    %cst_105 = arith.constant dense<0.000000e+00> : vector<32x128xf32>
    %98 = tpu.matmul %95, %97, %cst_105 {dimension_numbers = #tpu.dot_dimension_numbers<[1], [0], [0], [1], [0, 0, 1, 1], [], []>} : vector<32x128xf32>, vector<128x128xf32>, vector<32x128xf32> -> vector<32x128xf32>
    %99 = arith.addf %94, %98 : vector<32x128xf32>
    %c17_106 = arith.constant 17 : index
    %c0_107 = arith.constant 0 : index
    %100 = vector.load %arg8[%c17_106, %c0_107] : memref<56x128xf32, #tpu.memory_space<vmem>>, vector<32x128xf32>
    %c7_108 = arith.constant 7 : index
    %c0_109 = arith.constant 0 : index
    %c0_110 = arith.constant 0 : index
    %101 = vector.load %arg4[%c7_108, %c0_109, %c0_110] : memref<9x128x128xf32, #tpu.memory_space<vmem>>, vector<1x128x128xf32>
    %102 = vector.shape_cast %101 : vector<1x128x128xf32> to vector<128x128xf32>
    %cst_111 = arith.constant dense<0.000000e+00> : vector<32x128xf32>
    %103 = tpu.matmul %100, %102, %cst_111 {dimension_numbers = #tpu.dot_dimension_numbers<[1], [0], [0], [1], [0, 0, 1, 1], [], []>} : vector<32x128xf32>, vector<128x128xf32>, vector<32x128xf32> -> vector<32x128xf32>
    %104 = arith.addf %99, %103 : vector<32x128xf32>
    %c18_112 = arith.constant 18 : index
    %c0_113 = arith.constant 0 : index
    %105 = vector.load %arg8[%c18_112, %c0_113] : memref<56x128xf32, #tpu.memory_space<vmem>>, vector<32x128xf32>
    %c8_114 = arith.constant 8 : index
    %c0_115 = arith.constant 0 : index
    %c0_116 = arith.constant 0 : index
    %106 = vector.load %arg4[%c8_114, %c0_115, %c0_116] : memref<9x128x128xf32, #tpu.memory_space<vmem>>, vector<1x128x128xf32>
    %107 = vector.shape_cast %106 : vector<1x128x128xf32> to vector<128x128xf32>
    %cst_117 = arith.constant dense<0.000000e+00> : vector<32x128xf32>
    %108 = tpu.matmul %105, %107, %cst_117 {dimension_numbers = #tpu.dot_dimension_numbers<[1], [0], [0], [1], [0, 0, 1, 1], [], []>} : vector<32x128xf32>, vector<128x128xf32>, vector<32x128xf32> -> vector<32x128xf32>
    %109 = arith.addf %104, %108 : vector<32x128xf32>
    %c0_118 = arith.constant 0 : index
    %c0_119 = arith.constant 0 : index
    %110 = vector.load %arg5[%c0_118, %c0_119] : memref<1x128xf32, #tpu.memory_space<vmem>>, vector<1x128xf32>
    %111 = vector.broadcast %110 : vector<1x128xf32> to vector<32x128xf32>
    %112 = arith.addf %109, %111 : vector<32x128xf32>
    %cst_120 = arith.constant 0.000000e+00 : f32
    %113 = vector.broadcast %cst_120 : f32 to vector<32x128xf32>
    %114 = arith.maximumf %112, %113 : vector<32x128xf32>
    %c0_121 = arith.constant 0 : index
    %c0_122 = arith.constant 0 : index
    %c0_123 = arith.constant 0 : index
    %115 = vector.load %arg6[%c0_121, %c0_122, %c0_123] : memref<1x32x128xf32, #tpu.memory_space<vmem>>, vector<1x32x128xf32>
    %116 = vector.shape_cast %115 : vector<1x32x128xf32> to vector<32x128xf32>
    %117 = vector.shape_cast %114 : vector<32x128xf32> to vector<1x32x128xf32>
    tpu.vector_store %arg6[%c0_121, %c0_122, %c0_123], %117 {strides = array<i32>} : memref<1x32x128xf32, #tpu.memory_space<vmem>>, vector<1x32x128xf32>,
    return
  }
  func.func @transform_0(%arg0: i32) -> (i32, i32, i32, i32) {
    %c0_i32 = arith.constant 0 : i32
    %c0_i32_0 = arith.constant 0 : i32
    %c0_i32_1 = arith.constant 0 : i32
    %c0_i32_2 = arith.constant 0 : i32
    return %arg0, %c0_i32, %c0_i32_0, %c0_i32_1 : i32, i32, i32, i32
  }
  func.func @transform_1(%arg0: i32) -> (i32, i32, i32) {
    %c0_i32 = arith.constant 0 : i32
    %c0_i32_0 = arith.constant 0 : i32
    %c0_i32_1 = arith.constant 0 : i32
    %c0_i32_2 = arith.constant 0 : i32
    return %c0_i32, %c0_i32_0, %c0_i32_1 : i32, i32, i32
  }
  func.func @transform_2(%arg0: i32) -> (i32, i32) {
    %c0_i32 = arith.constant 0 : i32
    %c0_i32_0 = arith.constant 0 : i32
    %c0_i32_1 = arith.constant 0 : i32
    return %c0_i32, %c0_i32_0 : i32, i32
  }
  func.func @transform_3(%arg0: i32) -> (i32, i32, i32) {
    %c0_i32 = arith.constant 0 : i32
    %c0_i32_0 = arith.constant 0 : i32
    %c0_i32_1 = arith.constant 0 : i32
    %c0_i32_2 = arith.constant 0 : i32
    return %c0_i32, %c0_i32_0, %c0_i32_1 : i32, i32, i32
  }
  func.func @transform_4(%arg0: i32) -> (i32, i32) {
    %c0_i32 = arith.constant 0 : i32
    %c0_i32_0 = arith.constant 0 : i32
    %c0_i32_1 = arith.constant 0 : i32
    return %c0_i32, %c0_i32_0 : i32, i32
  }
  func.func @transform_5(%arg0: i32) -> (i32, i32, i32) {
    %c0_i32 = arith.constant 0 : i32
    %c0_i32_0 = arith.constant 0 : i32
    %c0_i32_1 = arith.constant 0 : i32
    return %arg0, %c0_i32, %c0_i32_0 : i32, i32, i32
  }
}

</mosaic_0001>

<llo_original>
// kernel: downsample_forward.1
$region0: #{downsample_forward.1}
  #allocation0 [shape = 'u32[]', space=smem, size = 0x4, offset = 0x4, fixed_abs, tag = 'smem constant byte address 0x4 - core index']
  #allocation1 [shape = 'u32[144,128]{1,0:T(1,128)}', space=vmem, size = 0x12000, scoped, tag = 'internal scratch']
  #allocation2 [shape = 'f32[80,128]{1,0:T(8,128)}', space=vmem, size = 0xa000, scoped, tag = 'scratch operand']
  #allocation3 [shape = 'f32[56,128]{1,0:T(8,128)}', space=vmem, size = 0x7000, scoped, tag = 'scratch operand']
  %s0 = inlined_call_operand.vmem [shape: f32[2,4,80,128], index: 0, kind: input, shape index: {}]
  %s1 = inlined_call_operand.vmem [shape: f32[9,128,128], index: 1, kind: input, shape index: {}]
  %s2 = inlined_call_operand.vmem [shape: f32[1,128], index: 2, kind: input, shape index: {}]
  %s3 = inlined_call_operand.vmem [shape: f32[9,128,128], index: 3, kind: input, shape index: {}]
  %s4 = inlined_call_operand.vmem [shape: f32[1,128], index: 4, kind: input, shape index: {}]
  %s5 = inlined_call_operand.vmem [shape: f32[2,32,128], index: 5, kind: output, shape index: {}]
  %s6 = sld [smem:[#allocation0]]
  $region53: #{downsample_forward.1} parent=0
    _
  %s8 = ssub.s32 1, %s6
  %s9 = scalar_select 0, %s8, %s6
  loop: start=0, step=1, limit=4
  $region2: #{downsample_forward.1} parent=0 // loop_pre_header
    _
  $region3: #{downsample_forward.1} parent=0 // loop_header
    %s11 = sphi 0, %s15
    %p12 = scmp.ge.s32.totalorder %s11, 4
    %s21 = sphi 0, %s23
    %s24 = sphi 0, %s21
    %s25 = sphi 0, %s24
    %s41 = sphi 0, %s25
    %s45 = sphi 0, %s45
    %s47 = sphi 0, %s45
    %s48 = sphi 0, %s47
    %s62 = sphi 0, %s48
    %s66 = sphi 0, %s66
    %s68 = sphi 0, %s66
    %s69 = sphi 0, %s68
    %s83 = sphi 0, %s69
    %s87 = sphi 0, %s87
    %s89 = sphi 0, %s87
    %s90 = sphi 0, %s89
    %s104 = sphi 0, %s90
    %s108 = sphi 0, %s108
    %s110 = sphi 0, %s108
    %s111 = sphi 0, %s110
    %s125 = sphi 0, %s111
    %s131 = sphi 0, %s133
    %s134 = sphi 0, %s131
    %s135 = sphi 0, %s134
    %s151 = sphi 0, %s135
  $region4: #{downsample_forward.1} parent=0 // loop_header_branch
    %14 = sbr.rel (%p12) target = $region8
  $region5: #{downsample_forward.1} parent=0 // loop_body
    %s16 = ssub.s32 %s11, 1
    %s17 = ssub.s32 %s11, 2
    %s18 = sadd.s32 %s11, 1
    %s19 = ssub.s32 %s11, %s18
    %p20 = scmp.eq.s32.totalorder %s19, 0
    %s22 = sadd.s32 %s21, 1
    %s23 = scalar_select %p20, %s21, %s22
    %p26 = pneg %p20
    %p27 = scmp.eq.s32.totalorder %s11, 1
    %p28 = por %p26, %p27
    %p29 = scmp.ne.s32.totalorder %s21, %s24
    %p30 = scmp.eq.s32.totalorder %s11, 0
    %p31 = por %p29, %p30
    %p32 = scmp.ne.s32.totalorder %s21, %s24
    %p33 = scmp.eq.s32.totalorder %s16, 1
    %p34 = por %p32, %p33
    %p35 = scmp.ne.s32.totalorder %s24, %s25
    %p36 = scmp.eq.s32.totalorder %s16, 0
    %p37 = por %p35, %p36
    %p38 = scmp.ne.s32.totalorder %s24, %s25
    %p39 = scmp.eq.s32.totalorder %s17, 1
    %p40 = por %p38, %p39
    %p42 = scmp.ne.s32.totalorder %s25, %s41
    %p43 = scmp.eq.s32.totalorder %s17, 0
    %p44 = por %p42, %p43
    %s46 = sadd.s32 %s45, 1
    %p49 = scmp.eq.s32.totalorder %s11, 1
    %p50 = scmp.ne.s32.totalorder %s45, %s47
    %p51 = scmp.eq.s32.totalorder %s11, 0
    %p52 = por %p50, %p51
    %p53 = scmp.ne.s32.totalorder %s45, %s47
    %p54 = scmp.eq.s32.totalorder %s16, 1
    %p55 = por %p53, %p54
    %p56 = scmp.ne.s32.totalorder %s47, %s48
    %p57 = scmp.eq.s32.totalorder %s16, 0
    %p58 = por %p56, %p57
    %p59 = scmp.ne.s32.totalorder %s47, %s48
    %p60 = scmp.eq.s32.totalorder %s17, 1
    %p61 = por %p59, %p60
    %p63 = scmp.ne.s32.totalorder %s48, %s62
    %p64 = scmp.eq.s32.totalorder %s17, 0
    %p65 = por %p63, %p64
    %s67 = sadd.s32 %s66, 1
    %p70 = scmp.eq.s32.totalorder %s11, 1
    %p71 = scmp.ne.s32.totalorder %s66, %s68
    %p72 = scmp.eq.s32.totalorder %s11, 0
    %p73 = por %p71, %p72
    %p74 = scmp.ne.s32.totalorder %s66, %s68
    %p75 = scmp.eq.s32.totalorder %s16, 1
    %p76 = por %p74, %p75
    %p77 = scmp.ne.s32.totalorder %s68, %s69
    %p78 = scmp.eq.s32.totalorder %s16, 0
    %p79 = por %p77, %p78
    %p80 = scmp.ne.s32.totalorder %s68, %s69
    %p81 = scmp.eq.s32.totalorder %s17, 1
    %p82 = por %p80, %p81
    %p84 = scmp.ne.s32.totalorder %s69, %s83
    %p85 = scmp.eq.s32.totalorder %s17, 0
    %p86 = por %p84, %p85
    %s88 = sadd.s32 %s87, 1
    %p91 = scmp.eq.s32.totalorder %s11, 1
    %p92 = scmp.ne.s32.totalorder %s87, %s89
    %p93 = scmp.eq.s32.totalorder %s11, 0
    %p94 = por %p92, %p93
    %p95 = scmp.ne.s32.totalorder %s87, %s89
    %p96 = scmp.eq.s32.totalorder %s16, 1
    %p97 = por %p95, %p96
    %p98 = scmp.ne.s32.totalorder %s89, %s90
    %p99 = scmp.eq.s32.totalorder %s16, 0
    %p100 = por %p98, %p99
    %p101 = scmp.ne.s32.totalorder %s89, %s90
    %p102 = scmp.eq.s32.totalorder %s17, 1
    %p103 = por %p101, %p102
    %p105 = scmp.ne.s32.totalorder %s90, %s104
    %p106 = scmp.eq.s32.totalorder %s17, 0
    %p107 = por %p105, %p106
    %s109 = sadd.s32 %s108, 1
    %p112 = scmp.eq.s32.totalorder %s11, 1
    %p113 = scmp.ne.s32.totalorder %s108, %s110
    %p114 = scmp.eq.s32.totalorder %s11, 0
    %p115 = por %p113, %p114
    %p116 = scmp.ne.s32.totalorder %s108, %s110
    %p117 = scmp.eq.s32.totalorder %s16, 1
    %p118 = por %p116, %p117
    %p119 = scmp.ne.s32.totalorder %s110, %s111
    %p120 = scmp.eq.s32.totalorder %s16, 0
    %p121 = por %p119, %p120
    %p122 = scmp.ne.s32.totalorder %s110, %s111
    %p123 = scmp.eq.s32.totalorder %s17, 1
    %p124 = por %p122, %p123
    %p126 = scmp.ne.s32.totalorder %s111, %s125
    %p127 = scmp.eq.s32.totalorder %s17, 0
    %p128 = por %p126, %p127
    %s129 = ssub.s32 %s11, %s18
    %p130 = scmp.eq.s32.totalorder %s129, 0
    %s132 = sadd.s32 %s131, 1
    %s133 = scalar_select %p130, %s131, %s132
    %p136 = pneg %p130
    %p137 = scmp.eq.s32.totalorder %s11, 1
    %p138 = por %p136, %p137
    %p139 = scmp.ne.s32.totalorder %s131, %s134
    %p140 = scmp.eq.s32.totalorder %s11, 0
    %p141 = por %p139, %p140
    %p142 = scmp.ne.s32.totalorder %s131, %s134
    %p143 = scmp.eq.s32.totalorder %s16, 1
    %p144 = por %p142, %p143
    %p145 = scmp.ne.s32.totalorder %s134, %s135
    %p146 = scmp.eq.s32.totalorder %s16, 0
    %p147 = por %p145, %p146
    %p148 = scmp.ne.s32.totalorder %s134, %s135
    %p149 = scmp.eq.s32.totalorder %s17, 1
    %p150 = por %p148, %p149
    %p152 = scmp.ne.s32.totalorder %s135, %s151
    %p153 = scmp.eq.s32.totalorder %s17, 0
    %p154 = por %p152, %p153
    %p155 = scmp.le.s32.totalorder 1, %s11
    %p156 = scmp.lt.s32.totalorder %s11, 3
    %p157 = pnand %p155, %p156
    %p158 = pneg %p157
    // Predicated region
    $region9: #{downsample_forward.1} parent=5 // pred_check
      _
    $region10: #{downsample_forward.1} parent=5 // pred_check_branch
      %160 = sbr.rel (%p157) target = $region12
    $region11: #{downsample_forward.1} parent=5 // pred_region
      %s161 = ssub.s32 %s11, 1
      // Predicated region
      $region13: #{downsample_forward.1} parent=11 // pred_check
        %p162 = pneg %p58
      $region14: #{downsample_forward.1} parent=11 // pred_check_branch
        %164 = sbr.rel (%p162) target = $region16
      $region15: #{downsample_forward.1} parent=11 // pred_region
        _
      $region16: #{downsample_forward.1} parent=11 // pred_fallthru
        _
      // Predicated region
      $region17: #{downsample_forward.1} parent=11 // pred_check
        %p165 = pneg %p79
      $region18: #{downsample_forward.1} parent=11 // pred_check_branch
        %167 = sbr.rel (%p165) target = $region20
      $region19: #{downsample_forward.1} parent=11 // pred_region
        _
      $region20: #{downsample_forward.1} parent=11 // pred_fallthru
        _
      // Predicated region
      $region21: #{downsample_forward.1} parent=11 // pred_check
        %p168 = pneg %p100
      $region22: #{downsample_forward.1} parent=11 // pred_check_branch
        %170 = sbr.rel (%p168) target = $region24
      $region23: #{downsample_forward.1} parent=11 // pred_region
        _
      $region24: #{downsample_forward.1} parent=11 // pred_fallthru
        _
      // Predicated region
      $region25: #{downsample_forward.1} parent=11 // pred_check
        %p171 = pneg %p121
      $region26: #{downsample_forward.1} parent=11 // pred_check_branch
        %173 = sbr.rel (%p171) target = $region28
      $region27: #{downsample_forward.1} parent=11 // pred_region
        _
      $region28: #{downsample_forward.1} parent=11 // pred_fallthru
        _
    $region12: #{downsample_forward.1} parent=5 // pred_fallthru
      _
    %p174 = scmp.lt.s32.totalorder %s11, 2
    // Predicated region
    $region29: #{downsample_forward.1} parent=5 // pred_check
      %p175 = pneg %p174
    $region30: #{downsample_forward.1} parent=5 // pred_check_branch
      %177 = sbr.rel (%p175) target = $region32
    $region31: #{downsample_forward.1} parent=5 // pred_region
      // Predicated region
      $region33: #{downsample_forward.1} parent=31 // pred_check
        %p178 = pneg %p31
      $region34: #{downsample_forward.1} parent=31 // pred_check_branch
        %180 = sbr.rel (%p178) target = $region36
      $region35: #{downsample_forward.1} parent=31 // pred_region
        %p181 = scmp.lt.s32.totalorder %s11, 1
        %s182 = scalar_select %p181, %s11, 1
        %s183 = smul.addr %s182, 40
        %s184 = smul.addr %s183, 8
        %s185 = scalar_lea.vmem %s0, %s184
      $region36: #{downsample_forward.1} parent=31 // pred_fallthru
        _
    $region32: #{downsample_forward.1} parent=5 // pred_fallthru
      _
    %p186 = scmp.le.s32.totalorder 1, %s11
    %p187 = scmp.lt.s32.totalorder %s11, 3
    %p188 = pnand %p186, %p187
    %p189 = pneg %p188
    // Predicated region
    $region37: #{downsample_forward.1} parent=5 // pred_check
      _
    $region38: #{downsample_forward.1} parent=5 // pred_check_branch
      %191 = sbr.rel (%p188) target = $region40
    $region39: #{downsample_forward.1} parent=5 // pred_region
      %s192 = ssub.s32 %s11, 1
      %p193 = scmp.lt.s32.totalorder %s16, 1
      %s194 = scalar_select %p193, %s16, 1
      %s195 = smul.addr %s194, 40
      %s196 = smul.addr %s195, 8
      %s197 = scalar_lea.vmem %s0, %s196
      %p198 = pneg %p37
      %p199 = pneg %p34
      %p200 = pneg %p58
      %p201 = pneg %p55
      %p202 = pneg %p79
      %p203 = pneg %p76
      %p204 = pneg %p100
      %p205 = pneg %p97
      %p206 = pneg %p121
      %p207 = pneg %p118
      %p208 = pneg %p147
      %p209 = pneg %p144
      %p210 = scmp.lt.s32.totalorder %s16, 1
      %s211 = scalar_select %p210, %s16, 1
      %s212 = smul.addr %s211, 4
      %s213 = smul.addr %s212, 8
      %s214 = scalar_lea.vmem %s5, %s213
      %p215 = scmp.lt.s32.totalorder %s16, 1
      %s216 = scalar_select %p215, %s16, 1
      %s217 = smul.addr %s216, 40
      %s218 = smul.addr %s217, 8
      %s219 = scalar_lea.vmem %s0, %s218
      %p220 = scmp.lt.s32.totalorder %s16, 1
      %s221 = scalar_select %p220, %s16, 1
      %s222 = smul.addr %s221, 4
      %s223 = smul.addr %s222, 8
      %s224 = scalar_lea.vmem %s5, %s223
      %v225 = vld [vmem:[%s219] sm:$0xff]
      %v226 = vld [vmem:[%s219 + $0x8] sm:$0xff]
      %v227 = vld [vmem:[%s219 + $0x10] sm:$0xff]
      %v228 = vld [vmem:[%s219 + $0x18] sm:$0xff]
      %v229 = vld [vmem:[%s219 + $0x20] sm:$0xff]
      %v230 = vld [vmem:[%s219 + $0x28] sm:$0xff]
      %v231 = vld [vmem:[%s219 + $0x30] sm:$0xff]
      %v232 = vld [vmem:[%s219 + $0x38] sm:$0xff]
      %v233 = vld [vmem:[%s219 + $0x40] sm:$0xff]
      %v234 = vld [vmem:[%s219 + $0x48] sm:$0xff]
      %s235 = scalar_lea.vmem %s219, 80
      %v236 = vld [vmem:[%s235] sm:$0xff]
      %v237 = vld [vmem:[%s235 + $0x8] sm:$0xff]
      %v238 = vld [vmem:[%s235 + $0x10] sm:$0xff]
      %v239 = vld [vmem:[%s235 + $0x18] sm:$0xff]
      %v240 = vld [vmem:[%s235 + $0x20] sm:$0xff]
      %v241 = vld [vmem:[%s235 + $0x28] sm:$0xff]
      %v242 = vld [vmem:[%s235 + $0x30] sm:$0xff]
      %v243 = vld [vmem:[%s235 + $0x38] sm:$0xff]
      %v244 = vld [vmem:[%s235 + $0x40] sm:$0xff]
      %v245 = vld [vmem:[%s235 + $0x48] sm:$0xff]
      %v246 = vmax.f32 %v225, %v236
      %v247 = vmax.f32 %v226, %v237
      %v248 = vmax.f32 %v227, %v238
      %v249 = vmax.f32 %v228, %v239
      %v250 = vmax.f32 %v229, %v240
      %v251 = vmax.f32 %v230, %v241
      %v252 = vmax.f32 %v231, %v242
      %v253 = vmax.f32 %v232, %v243
      %v254 = vmax.f32 %v233, %v244
      %v255 = vmax.f32 %v234, %v245
      %s256 = scalar_lea.vmem %s219, 160
      %v257 = vld [vmem:[%s256] sm:$0xff]
      %v258 = vld [vmem:[%s256 + $0x8] sm:$0xff]
      %v259 = vld [vmem:[%s256 + $0x10] sm:$0xff]
      %v260 = vld [vmem:[%s256 + $0x18] sm:$0xff]
      %v261 = vld [vmem:[%s256 + $0x20] sm:$0xff]
      %v262 = vld [vmem:[%s256 + $0x28] sm:$0xff]
      %v263 = vld [vmem:[%s256 + $0x30] sm:$0xff]
      %v264 = vld [vmem:[%s256 + $0x38] sm:$0xff]
      %v265 = vld [vmem:[%s256 + $0x40] sm:$0xff]
      %v266 = vld [vmem:[%s256 + $0x48] sm:$0xff]
      %s267 = scalar_lea.vmem %s219, 240
      %v268 = vld [vmem:[%s267] sm:$0xff]
      %v269 = vld [vmem:[%s267 + $0x8] sm:$0xff]
      %v270 = vld [vmem:[%s267 + $0x10] sm:$0xff]
      %v271 = vld [vmem:[%s267 + $0x18] sm:$0xff]
      %v272 = vld [vmem:[%s267 + $0x20] sm:$0xff]
      %v273 = vld [vmem:[%s267 + $0x28] sm:$0xff]
      %v274 = vld [vmem:[%s267 + $0x30] sm:$0xff]
      %v275 = vld [vmem:[%s267 + $0x38] sm:$0xff]
      %v276 = vld [vmem:[%s267 + $0x40] sm:$0xff]
      %v277 = vld [vmem:[%s267 + $0x48] sm:$0xff]
      %v278 = vmax.f32 %v257, %v268
      %v279 = vmax.f32 %v258, %v269
      %v280 = vmax.f32 %v259, %v270
      %v281 = vmax.f32 %v260, %v271
      %v282 = vmax.f32 %v261, %v272
      %v283 = vmax.f32 %v262, %v273
      %v284 = vmax.f32 %v263, %v274
      %v285 = vmax.f32 %v264, %v275
      %v286 = vmax.f32 %v265, %v276
      %v287 = vmax.f32 %v266, %v277
      %v288 = vmax.f32 %v246, %v278
      %v289 = vmax.f32 %v247, %v279
      %v290 = vmax.f32 %v248, %v280
      %v291 = vmax.f32 %v249, %v281
      %v292 = vmax.f32 %v250, %v282
      %v293 = vmax.f32 %v251, %v283
      %v294 = vmax.f32 %v252, %v284
      %v295 = vmax.f32 %v253, %v285
      %v296 = vmax.f32 %v254, %v286
      %v297 = vmax.f32 %v255, %v287
      %298 = vst [vmem:[#allocation2] sm:$0xff] %v288
      %299 = vst [vmem:[#allocation2 + $0x8] sm:$0xff] %v289
      %300 = vst [vmem:[#allocation2 + $0x10] sm:$0xff] %v290
      %301 = vst [vmem:[#allocation2 + $0x18] sm:$0xff] %v291
      %302 = vst [vmem:[#allocation2 + $0x20] sm:$0xff] %v292
      %303 = vst [vmem:[#allocation2 + $0x28] sm:$0xff] %v293
      %304 = vst [vmem:[#allocation2 + $0x30] sm:$0xff] %v294
      %305 = vst [vmem:[#allocation2 + $0x38] sm:$0xff] %v295
      %306 = vst [vmem:[#allocation2 + $0x40] sm:$0xff] %v296
      %307 = vst [vmem:[#allocation2 + $0x48] sm:$0xff] %v297
      %v308 = vld [vmem:[#allocation2] sm:$0xff]
      %v309 = vld [vmem:[#allocation2 + $0x8] sm:$0xff]
      %v310 = vld [vmem:[#allocation2 + $0x10] sm:$0xff]
      %v311 = vld [vmem:[#allocation2 + $0x18] sm:$0xff]
      %v312 = vld [vmem:[#allocation2 + $0x20] sm:$0xff]
      %v313 = vld [vmem:[#allocation2 + $0x28] sm:$0xff]
      %v314 = vld [vmem:[#allocation2 + $0x30] sm:$0xff]
      %v315 = vld [vmem:[%s1] sm:$0xff]
      %v316 = vld [vmem:[%s1 + $0x8] sm:$0xff]
      %v317 = vld [vmem:[%s1 + $0x10] sm:$0xff]
      %v318 = vld [vmem:[%s1 + $0x18] sm:$0xff]
      %v319 = vld [vmem:[%s1 + $0x20] sm:$0xff]
      %v320 = vld [vmem:[%s1 + $0x28] sm:$0xff]
      %v321 = vld [vmem:[%s1 + $0x30] sm:$0xff]
      %v322 = vld [vmem:[%s1 + $0x38] sm:$0xff]
      %v323 = vld [vmem:[%s1 + $0x40] sm:$0xff]
      %v324 = vld [vmem:[%s1 + $0x48] sm:$0xff]
      %v325 = vld [vmem:[%s1 + $0x50] sm:$0xff]
      %v326 = vld [vmem:[%s1 + $0x58] sm:$0xff]
      %v327 = vld [vmem:[%s1 + $0x60] sm:$0xff]
      %v328 = vld [vmem:[%s1 + $0x68] sm:$0xff]
      %v329 = vld [vmem:[%s1 + $0x70] sm:$0xff]
      %v330 = vld [vmem:[%s1 + $0x78] sm:$0xff]
      %v331 = vld [vmem:[#allocation2 + $0x1] sm:$0xff]
      %v332 = vld [vmem:[#allocation2 + $0x9] sm:$0xff]
      %v333 = vld [vmem:[#allocation2 + $0x11] sm:$0xff]
      %v334 = vld [vmem:[#allocation2 + $0x19] sm:$0xff]
      %v335 = vld [vmem:[#allocation2 + $0x21] sm:$0xff]
      %v336 = vld [vmem:[#allocation2 + $0x29] sm:$0xff]
      %v337 = vld [vmem:[#allocation2 + $0x31] sm:$0xff]
      %s338 = scalar_lea.vmem %s1, 128
      %v339 = vld [vmem:[%s338] sm:$0xff]
      %v340 = vld [vmem:[%s338 + $0x8] sm:$0xff]
      %v341 = vld [vmem:[%s338 + $0x10] sm:$0xff]
      %v342 = vld [vmem:[%s338 + $0x18] sm:$0xff]
      %v343 = vld [vmem:[%s338 + $0x20] sm:$0xff]
      %v344 = vld [vmem:[%s338 + $0x28] sm:$0xff]
      %v345 = vld [vmem:[%s338 + $0x30] sm:$0xff]
      %v346 = vld [vmem:[%s338 + $0x38] sm:$0xff]
      %v347 = vld [vmem:[%s338 + $0x40] sm:$0xff]
      %v348 = vld [vmem:[%s338 + $0x48] sm:$0xff]
      %v349 = vld [vmem:[%s338 + $0x50] sm:$0xff]
      %v350 = vld [vmem:[%s338 + $0x58] sm:$0xff]
      %v351 = vld [vmem:[%s338 + $0x60] sm:$0xff]
      %v352 = vld [vmem:[%s338 + $0x68] sm:$0xff]
      %v353 = vld [vmem:[%s338 + $0x70] sm:$0xff]
      %v354 = vld [vmem:[%s338 + $0x78] sm:$0xff]
      %355 = vmatprep.subr.mxu0 0.0
      %356 = vmatpush1.msra.mxu0 %v354
      %357 = vmatprep.subr.mxu0 0.0
      %358 = vmatpush1.msra.mxu0 %v353
      %359 = vmatprep.subr.mxu0 0.0
      %360 = vmatpush1.msra.mxu0 %v352
      %361 = vmatprep.subr.mxu0 0.0
      %362 = vmatpush1.msra.mxu0 %v351
      %363 = vmatprep.subr.mxu0 0.0
      %364 = vmatpush1.msra.mxu0 %v350
      %365 = vmatprep.subr.mxu0 0.0
      %366 = vmatpush1.msra.mxu0 %v349
      %367 = vmatprep.subr.mxu0 0.0
      %368 = vmatpush1.msra.mxu0 %v348
      %369 = vmatprep.subr.mxu0 0.0
      %370 = vmatpush1.msra.mxu0 %v347
      %371 = vmatprep.subr.mxu0 0.0
      %372 = vmatpush1.msra.mxu0 %v346
      %373 = vmatprep.subr.mxu0 0.0
      %374 = vmatpush1.msra.mxu0 %v345
      %375 = vmatprep.subr.mxu0 0.0
      %376 = vmatpush1.msra.mxu0 %v344
      %377 = vmatprep.subr.mxu0 0.0
      %378 = vmatpush1.msra.mxu0 %v343
      %379 = vmatprep.subr.mxu0 0.0
      %380 = vmatpush1.msra.mxu0 %v342
      %381 = vmatprep.subr.mxu0 0.0
      %382 = vmatpush1.msra.mxu0 %v341
      %383 = vmatprep.subr.mxu0 0.0
      %384 = vmatpush1.msra.mxu0 %v340
      %385 = vmatprep.subr.mxu0 0.0
      %386 = vmatpush1.msra.mxu0 %v339
      %387 = vmatprep.subr.mxu0 0.0
      %388 = vmatpush2.msra.mxu0 0.0
      %389 = vmatprep.subr.mxu0 0.0
      %390 = vmatpush2.msra.mxu0 0.0
      %391 = vmatprep.subr.mxu0 0.0
      %392 = vmatpush2.msra.mxu0 0.0
      %393 = vmatprep.subr.mxu0 0.0
      %394 = vmatpush2.msra.mxu0 0.0
      %395 = vmatprep.subr.mxu0 0.0
      %396 = vmatpush2.msra.mxu0 0.0
      %397 = vmatprep.subr.mxu0 0.0
      %398 = vmatpush2.msra.mxu0 0.0
      %399 = vmatprep.subr.mxu0 0.0
      %400 = vmatpush2.msra.mxu0 0.0
      %401 = vmatprep.subr.mxu0 0.0
      %402 = vmatpush2.msra.mxu0 0.0
      %403 = vmatprep.subr.mxu0 0.0
      %404 = vmatpush2.msra.mxu0 0.0
      %405 = vmatprep.subr.mxu0 0.0
      %406 = vmatpush2.msra.mxu0 0.0
      %407 = vmatprep.subr.mxu0 0.0
      %408 = vmatpush2.msra.mxu0 0.0
      %409 = vmatprep.subr.mxu0 0.0
      %410 = vmatpush2.msra.mxu0 0.0
      %411 = vmatprep.subr.mxu0 0.0
      %412 = vmatpush2.msra.mxu0 0.0
      %413 = vmatprep.subr.mxu0 0.0
      %414 = vmatpush2.msra.mxu0 0.0
      %415 = vmatprep.subr.mxu0 0.0
      %416 = vmatpush2.msra.mxu0 0.0
      %417 = vmatprep.subr.mxu0 0.0
      %418 = vmatpush2.msra.mxu0 0.0
      %419 = vmatprep.mubr.f32.mxu0 0.0
      %420 = vmatmul.mubr.f32.gmra.mxu0 %v331
      %v421 = vpop.f32.mrf.mxu0
      %v422 = vadd.f32 0.0, %v421
      %v423 = vpop.f32.mrf.mxu0
      %424 = vmatprep.mubr.f32.mxu0 0.0
      %425 = vmatmul.mubr.f32.gmra.mxu0 %v332
      %v426 = vpop.f32.mrf.mxu0
      %v427 = vadd.f32 0.0, %v426
      %v428 = vpop.f32.mrf.mxu0
      %429 = vmatprep.mubr.f32.mxu0 0.0
      %430 = vmatmul.mubr.f32.gmra.mxu0 %v333
      %v431 = vpop.f32.mrf.mxu0
      %v432 = vadd.f32 0.0, %v431
      %v433 = vpop.f32.mrf.mxu0
      %434 = vmatprep.mubr.f32.mxu0 0.0
      %435 = vmatmul.mubr.f32.gmra.mxu0 %v334
      %v436 = vpop.f32.mrf.mxu0
      %v437 = vadd.f32 0.0, %v436
      %v438 = vpop.f32.mrf.mxu0
      %439 = vmatprep.mubr.f32.mxu0 0.0
      %440 = vmatmul.mubr.f32.gmra.mxu0 %v335
      %v441 = vpop.f32.mrf.mxu0
      %v442 = vadd.f32 0.0, %v441
      %v443 = vpop.f32.mrf.mxu0
      %444 = vmatprep.mubr.f32.mxu0 0.0
      %445 = vmatmul.mubr.f32.gmra.mxu0 %v336
      %v446 = vpop.f32.mrf.mxu0
      %v447 = vadd.f32 0.0, %v446
      %v448 = vpop.f32.mrf.mxu0
      %449 = vmatprep.mubr.f32.mxu0 0.0
      %450 = vmatmul.mubr.f32.gmra.mxu0 %v337
      %v451 = vpop.f32.mrf.mxu0
      %v452 = vadd.f32 0.0, %v451
      %v453 = vpop.f32.mrf.mxu0
      %454 = vdwg.mxu0
      %455 = vmatprep.subr.mxu0 0.0
      %456 = vmatpush1.msra.mxu0 %v330
      %457 = vmatprep.subr.mxu0 0.0
      %458 = vmatpush1.msra.mxu0 %v329
      %459 = vmatprep.subr.mxu0 0.0
      %460 = vmatpush1.msra.mxu0 %v328
      %461 = vmatprep.subr.mxu0 0.0
      %462 = vmatpush1.msra.mxu0 %v327
      %463 = vmatprep.subr.mxu0 0.0
      %464 = vmatpush1.msra.mxu0 %v326
      %465 = vmatprep.subr.mxu0 0.0
      %466 = vmatpush1.msra.mxu0 %v325
      %467 = vmatprep.subr.mxu0 0.0
      %468 = vmatpush1.msra.mxu0 %v324
      %469 = vmatprep.subr.mxu0 0.0
      %470 = vmatpush1.msra.mxu0 %v323
      %471 = vmatprep.subr.mxu0 0.0
      %472 = vmatpush1.msra.mxu0 %v322
      %473 = vmatprep.subr.mxu0 0.0
      %474 = vmatpush1.msra.mxu0 %v321
      %475 = vmatprep.subr.mxu0 0.0
      %476 = vmatpush1.msra.mxu0 %v320
      %477 = vmatprep.subr.mxu0 0.0
      %478 = vmatpush1.msra.mxu0 %v319
      %479 = vmatprep.subr.mxu0 0.0
      %480 = vmatpush1.msra.mxu0 %v318
      %481 = vmatprep.subr.mxu0 0.0
      %482 = vmatpush1.msra.mxu0 %v317
      %483 = vmatprep.subr.mxu0 0.0
      %484 = vmatpush1.msra.mxu0 %v316
      %485 = vmatprep.subr.mxu0 0.0
      %486 = vmatpush1.msra.mxu0 %v315
      %487 = vmatprep.subr.mxu0 0.0
      %488 = vmatpush2.msra.mxu0 0.0
      %489 = vmatprep.subr.mxu0 0.0
      %490 = vmatpush2.msra.mxu0 0.0
      %491 = vmatprep.subr.mxu0 0.0
      %492 = vmatpush2.msra.mxu0 0.0
      %493 = vmatprep.subr.mxu0 0.0
      %494 = vmatpush2.msra.mxu0 0.0
      %495 = vmatprep.subr.mxu0 0.0
      %496 = vmatpush2.msra.mxu0 0.0
      %497 = vmatprep.subr.mxu0 0.0
      %498 = vmatpush2.msra.mxu0 0.0
      %499 = vmatprep.subr.mxu0 0.0
      %500 = vmatpush2.msra.mxu0 0.0
      %501 = vmatprep.subr.mxu0 0.0
      %502 = vmatpush2.msra.mxu0 0.0
      %503 = vmatprep.subr.mxu0 0.0
      %504 = vmatpush2.msra.mxu0 0.0
      %505 = vmatprep.subr.mxu0 0.0
      %506 = vmatpush2.msra.mxu0 0.0
      %507 = vmatprep.subr.mxu0 0.0
      %508 = vmatpush2.msra.mxu0 0.0
      %509 = vmatprep.subr.mxu0 0.0
      %510 = vmatpush2.msra.mxu0 0.0
      %511 = vmatprep.subr.mxu0 0.0
      %512 = vmatpush2.msra.mxu0 0.0
      %513 = vmatprep.subr.mxu0 0.0
      %514 = vmatpush2.msra.mxu0 0.0
      %515 = vmatprep.subr.mxu0 0.0
      %516 = vmatpush2.msra.mxu0 0.0
      %517 = vmatprep.subr.mxu0 0.0
      %518 = vmatpush2.msra.mxu0 0.0
      %519 = vmatprep.mubr.f32.mxu0 0.0
      %520 = vmatmul.mubr.f32.gmra.mxu0 %v308
      %v521 = vpop.f32.mrf.mxu0
      %v522 = vadd.f32 %v422, %v521
      %v523 = vpop.f32.mrf.mxu0
      %524 = vmatprep.mubr.f32.mxu0 0.0
      %525 = vmatmul.mubr.f32.gmra.mxu0 %v309
      %v526 = vpop.f32.mrf.mxu0
      %v527 = vadd.f32 %v427, %v526
      %v528 = vpop.f32.mrf.mxu0
      %529 = vmatprep.mubr.f32.mxu0 0.0
      %530 = vmatmul.mubr.f32.gmra.mxu0 %v310
      %v531 = vpop.f32.mrf.mxu0
      %v532 = vadd.f32 %v432, %v531
      %v533 = vpop.f32.mrf.mxu0
      %534 = vmatprep.mubr.f32.mxu0 0.0
      %535 = vmatmul.mubr.f32.gmra.mxu0 %v311
      %v536 = vpop.f32.mrf.mxu0
      %v537 = vadd.f32 %v437, %v536
      %v538 = vpop.f32.mrf.mxu0
      %539 = vmatprep.mubr.f32.mxu0 0.0
      %540 = vmatmul.mubr.f32.gmra.mxu0 %v312
      %v541 = vpop.f32.mrf.mxu0
      %v542 = vadd.f32 %v442, %v541
      %v543 = vpop.f32.mrf.mxu0
      %544 = vmatprep.mubr.f32.mxu0 0.0
      %545 = vmatmul.mubr.f32.gmra.mxu0 %v313
      %v546 = vpop.f32.mrf.mxu0
      %v547 = vadd.f32 %v447, %v546
      %v548 = vpop.f32.mrf.mxu0
      %549 = vmatprep.mubr.f32.mxu0 0.0
      %550 = vmatmul.mubr.f32.gmra.mxu0 %v314
      %v551 = vpop.f32.mrf.mxu0
      %v552 = vadd.f32 %v452, %v551
      %v553 = vpop.f32.mrf.mxu0
      %554 = vdwg.mxu0
      %v555 = vld [vmem:[#allocation2 + $0x2] sm:$0xff]
      %v556 = vld [vmem:[#allocation2 + $0xa] sm:$0xff]
      %v557 = vld [vmem:[#allocation2 + $0x12] sm:$0xff]
      %v558 = vld [vmem:[#allocation2 + $0x1a] sm:$0xff]
      %v559 = vld [vmem:[#allocation2 + $0x22] sm:$0xff]
      %v560 = vld [vmem:[#allocation2 + $0x2a] sm:$0xff]
      %v561 = vld [vmem:[#allocation2 + $0x32] sm:$0xff]
      %s562 = scalar_lea.vmem %s1, 256
      %v563 = vld [vmem:[%s562] sm:$0xff]
      %v564 = vld [vmem:[%s562 + $0x8] sm:$0xff]
      %v565 = vld [vmem:[%s562 + $0x10] sm:$0xff]
      %v566 = vld [vmem:[%s562 + $0x18] sm:$0xff]
      %v567 = vld [vmem:[%s562 + $0x20] sm:$0xff]
      %v568 = vld [vmem:[%s562 + $0x28] sm:$0xff]
      %v569 = vld [vmem:[%s562 + $0x30] sm:$0xff]
      %v570 = vld [vmem:[%s562 + $0x38] sm:$0xff]
      %v571 = vld [vmem:[%s562 + $0x40] sm:$0xff]
      %v572 = vld [vmem:[%s562 + $0x48] sm:$0xff]
      %v573 = vld [vmem:[%s562 + $0x50] sm:$0xff]
      %v574 = vld [vmem:[%s562 + $0x58] sm:$0xff]
      %v575 = vld [vmem:[%s562 + $0x60] sm:$0xff]
      %v576 = vld [vmem:[%s562 + $0x68] sm:$0xff]
      %v577 = vld [vmem:[%s562 + $0x70] sm:$0xff]
      %v578 = vld [vmem:[%s562 + $0x78] sm:$0xff]
      %579 = vmatprep.subr.mxu0 0.0
      %580 = vmatpush1.msra.mxu0 %v578
      %581 = vmatprep.subr.mxu0 0.0
      %582 = vmatpush1.msra.mxu0 %v577
      %583 = vmatprep.subr.mxu0 0.0
      %584 = vmatpush1.msra.mxu0 %v576
      %585 = vmatprep.subr.mxu0 0.0
      %586 = vmatpush1.msra.mxu0 %v575
      %587 = vmatprep.subr.mxu0 0.0
      %588 = vmatpush1.msra.mxu0 %v574
      %589 = vmatprep.subr.mxu0 0.0
      %590 = vmatpush1.msra.mxu0 %v573
      %591 = vmatprep.subr.mxu0 0.0
      %592 = vmatpush1.msra.mxu0 %v572
      %593 = vmatprep.subr.mxu0 0.0
      %594 = vmatpush1.msra.mxu0 %v571
      %595 = vmatprep.subr.mxu0 0.0
      %596 = vmatpush1.msra.mxu0 %v570
      %597 = vmatprep.subr.mxu0 0.0
      %598 = vmatpush1.msra.mxu0 %v569
      %599 = vmatprep.subr.mxu0 0.0
      %600 = vmatpush1.msra.mxu0 %v568
      %601 = vmatprep.subr.mxu0 0.0
      %602 = vmatpush1.msra.mxu0 %v567
      %603 = vmatprep.subr.mxu0 0.0
      %604 = vmatpush1.msra.mxu0 %v566
      %605 = vmatprep.subr.mxu0 0.0
      %606 = vmatpush1.msra.mxu0 %v565
      %607 = vmatprep.subr.mxu0 0.0
      %608 = vmatpush1.msra.mxu0 %v564
      %609 = vmatprep.subr.mxu0 0.0
      %610 = vmatpush1.msra.mxu0 %v563
      %611 = vmatprep.subr.mxu0 0.0
      %612 = vmatpush2.msra.mxu0 0.0
      %613 = vmatprep.subr.mxu0 0.0
      %614 = vmatpush2.msra.mxu0 0.0
      %615 = vmatprep.subr.mxu0 0.0
      %616 = vmatpush2.msra.mxu0 0.0
      %617 = vmatprep.subr.mxu0 0.0
      %618 = vmatpush2.msra.mxu0 0.0
      %619 = vmatprep.subr.mxu0 0.0
      %620 = vmatpush2.msra.mxu0 0.0
      %621 = vmatprep.subr.mxu0 0.0
      %622 = vmatpush2.msra.mxu0 0.0
      %623 = vmatprep.subr.mxu0 0.0
      %624 = vmatpush2.msra.mxu0 0.0
      %625 = vmatprep.subr.mxu0 0.0
      %626 = vmatpush2.msra.mxu0 0.0
      %627 = vmatprep.subr.mxu0 0.0
      %628 = vmatpush2.msra.mxu0 0.0
      %629 = vmatprep.subr.mxu0 0.0
      %630 = vmatpush2.msra.mxu0 0.0
      %631 = vmatprep.subr.mxu0 0.0
      %632 = vmatpush2.msra.mxu0 0.0
      %633 = vmatprep.subr.mxu0 0.0
      %634 = vmatpush2.msra.mxu0 0.0
      %635 = vmatprep.subr.mxu0 0.0
      %636 = vmatpush2.msra.mxu0 0.0
      %637 = vmatprep.subr.mxu0 0.0
      %638 = vmatpush2.msra.mxu0 0.0
      %639 = vmatprep.subr.mxu0 0.0
      %640 = vmatpush2.msra.mxu0 0.0
      %641 = vmatprep.subr.mxu0 0.0
      %642 = vmatpush2.msra.mxu0 0.0
      %643 = vmatprep.mubr.f32.mxu0 0.0
      %644 = vmatmul.mubr.f32.gmra.mxu0 %v555
      %v645 = vpop.f32.mrf.mxu0
      %v646 = vadd.f32 0.0, %v645
      %v647 = vpop.f32.mrf.mxu0
      %648 = vmatprep.mubr.f32.mxu0 0.0
      %649 = vmatmul.mubr.f32.gmra.mxu0 %v556
      %v650 = vpop.f32.mrf.mxu0
      %v651 = vadd.f32 0.0, %v650
      %v652 = vpop.f32.mrf.mxu0
      %653 = vmatprep.mubr.f32.mxu0 0.0
      %654 = vmatmul.mubr.f32.gmra.mxu0 %v557
      %v655 = vpop.f32.mrf.mxu0
      %v656 = vadd.f32 0.0, %v655
      %v657 = vpop.f32.mrf.mxu0
      %658 = vmatprep.mubr.f32.mxu0 0.0
      %659 = vmatmul.mubr.f32.gmra.mxu0 %v558
      %v660 = vpop.f32.mrf.mxu0
      %v661 = vadd.f32 0.0, %v660
      %v662 = vpop.f32.mrf.mxu0
      %663 = vmatprep.mubr.f32.mxu0 0.0
      %664 = vmatmul.mubr.f32.gmra.mxu0 %v559
      %v665 = vpop.f32.mrf.mxu0
      %v666 = vadd.f32 0.0, %v665
      %v667 = vpop.f32.mrf.mxu0
      %668 = vmatprep.mubr.f32.mxu0 0.0
      %669 = vmatmul.mubr.f32.gmra.mxu0 %v560
      %v670 = vpop.f32.mrf.mxu0
      %v671 = vadd.f32 0.0, %v670
      %v672 = vpop.f32.mrf.mxu0
      %673 = vmatprep.mubr.f32.mxu0 0.0
      %674 = vmatmul.mubr.f32.gmra.mxu0 %v561
      %v675 = vpop.f32.mrf.mxu0
      %v676 = vadd.f32 0.0, %v675
      %v677 = vpop.f32.mrf.mxu0
      %678 = vdwg.mxu0
      %v679 = vadd.f32 %v522, %v646
      %v680 = vadd.f32 %v527, %v651
      %v681 = vadd.f32 %v532, %v656
      %v682 = vadd.f32 %v537, %v661
      %v683 = vadd.f32 %v542, %v666
      %v684 = vadd.f32 %v547, %v671
      %v685 = vadd.f32 %v552, %v676
      %v686 = vld [vmem:[#allocation2 + $0x8] sm:$0xff]
      %v687 = vld [vmem:[#allocation2 + $0x10] sm:$0xff]
      %v688 = vld [vmem:[#allocation2 + $0x18] sm:$0xff]
      %v689 = vld [vmem:[#allocation2 + $0x20] sm:$0xff]
      %v690 = vld [vmem:[#allocation2 + $0x28] sm:$0xff]
      %v691 = vld [vmem:[#allocation2 + $0x30] sm:$0xff]
      %v692 = vld [vmem:[#allocation2 + $0x38] sm:$0xff]
      %s693 = scalar_lea.vmem %s1, 384
      %v694 = vld [vmem:[%s693] sm:$0xff]
      %v695 = vld [vmem:[%s693 + $0x8] sm:$0xff]
      %v696 = vld [vmem:[%s693 + $0x10] sm:$0xff]
      %v697 = vld [vmem:[%s693 + $0x18] sm:$0xff]
      %v698 = vld [vmem:[%s693 + $0x20] sm:$0xff]
      %v699 = vld [vmem:[%s693 + $0x28] sm:$0xff]
      %v700 = vld [vmem:[%s693 + $0x30] sm:$0xff]
      %v701 = vld [vmem:[%s693 + $0x38] sm:$0xff]
      %v702 = vld [vmem:[%s693 + $0x40] sm:$0xff]
      %v703 = vld [vmem:[%s693 + $0x48] sm:$0xff]
      %v704 = vld [vmem:[%s693 + $0x50] sm:$0xff]
      %v705 = vld [vmem:[%s693 + $0x58] sm:$0xff]
      %v706 = vld [vmem:[%s693 + $0x60] sm:$0xff]
      %v707 = vld [vmem:[%s693 + $0x68] sm:$0xff]
      %v708 = vld [vmem:[%s693 + $0x70] sm:$0xff]
      %v709 = vld [vmem:[%s693 + $0x78] sm:$0xff]
      %710 = vmatprep.subr.mxu0 0.0
      %711 = vmatpush1.msra.mxu0 %v709
      %712 = vmatprep.subr.mxu0 0.0
      %713 = vmatpush1.msra.mxu0 %v708
      %714 = vmatprep.subr.mxu0 0.0
      %715 = vmatpush1.msra.mxu0 %v707
      %716 = vmatprep.subr.mxu0 0.0
      %717 = vmatpush1.msra.mxu0 %v706
      %718 = vmatprep.subr.mxu0 0.0
      %719 = vmatpush1.msra.mxu0 %v705
      %720 = vmatprep.subr.mxu0 0.0
      %721 = vmatpush1.msra.mxu0 %v704
      %722 = vmatprep.subr.mxu0 0.0
      %723 = vmatpush1.msra.mxu0 %v703
      %724 = vmatprep.subr.mxu0 0.0
      %725 = vmatpush1.msra.mxu0 %v702
      %726 = vmatprep.subr.mxu0 0.0
      %727 = vmatpush1.msra.mxu0 %v701
      %728 = vmatprep.subr.mxu0 0.0
      %729 = vmatpush1.msra.mxu0 %v700
      %730 = vmatprep.subr.mxu0 0.0
      %731 = vmatpush1.msra.mxu0 %v699
      %732 = vmatprep.subr.mxu0 0.0
      %733 = vmatpush1.msra.mxu0 %v698
      %734 = vmatprep.subr.mxu0 0.0
      %735 = vmatpush1.msra.mxu0 %v697
      %736 = vmatprep.subr.mxu0 0.0
      %737 = vmatpush1.msra.mxu0 %v696
      %738 = vmatprep.subr.mxu0 0.0
      %739 = vmatpush1.msra.mxu0 %v695
      %740 = vmatprep.subr.mxu0 0.0
      %741 = vmatpush1.msra.mxu0 %v694
      %742 = vmatprep.subr.mxu0 0.0
      %743 = vmatpush2.msra.mxu0 0.0
      %744 = vmatprep.subr.mxu0 0.0
      %745 = vmatpush2.msra.mxu0 0.0
      %746 = vmatprep.subr.mxu0 0.0
      %747 = vmatpush2.msra.mxu0 0.0
      %748 = vmatprep.subr.mxu0 0.0
      %749 = vmatpush2.msra.mxu0 0.0
      %750 = vmatprep.subr.mxu0 0.0
      %751 = vmatpush2.msra.mxu0 0.0
      %752 = vmatprep.subr.mxu0 0.0
      %753 = vmatpush2.msra.mxu0 0.0
      %754 = vmatprep.subr.mxu0 0.0
      %755 = vmatpush2.msra.mxu0 0.0
      %756 = vmatprep.subr.mxu0 0.0
      %757 = vmatpush2.msra.mxu0 0.0
      %758 = vmatprep.subr.mxu0 0.0
      %759 = vmatpush2.msra.mxu0 0.0
      %760 = vmatprep.subr.mxu0 0.0
      %761 = vmatpush2.msra.mxu0 0.0
      %762 = vmatprep.subr.mxu0 0.0
      %763 = vmatpush2.msra.mxu0 0.0
      %764 = vmatprep.subr.mxu0 0.0
      %765 = vmatpush2.msra.mxu0 0.0
      %766 = vmatprep.subr.mxu0 0.0
      %767 = vmatpush2.msra.mxu0 0.0
      %768 = vmatprep.subr.mxu0 0.0
      %769 = vmatpush2.msra.mxu0 0.0
      %770 = vmatprep.subr.mxu0 0.0
      %771 = vmatpush2.msra.mxu0 0.0
      %772 = vmatprep.subr.mxu0 0.0
      %773 = vmatpush2.msra.mxu0 0.0
      %774 = vmatprep.mubr.f32.mxu0 0.0
      %775 = vmatmul.mubr.f32.gmra.mxu0 %v686
      %v776 = vpop.f32.mrf.mxu0
      %v777 = vadd.f32 0.0, %v776
      %v778 = vpop.f32.mrf.mxu0
      %779 = vmatprep.mubr.f32.mxu0 0.0
      %780 = vmatmul.mubr.f32.gmra.mxu0 %v687
      %v781 = vpop.f32.mrf.mxu0
      %v782 = vadd.f32 0.0, %v781
      %v783 = vpop.f32.mrf.mxu0
      %784 = vmatprep.mubr.f32.mxu0 0.0
      %785 = vmatmul.mubr.f32.gmra.mxu0 %v688
      %v786 = vpop.f32.mrf.mxu0
      %v787 = vadd.f32 0.0, %v786
      %v788 = vpop.f32.mrf.mxu0
      %789 = vmatprep.mubr.f32.mxu0 0.0
      %790 = vmatmul.mubr.f32.gmra.mxu0 %v689
      %v791 = vpop.f32.mrf.mxu0
      %v792 = vadd.f32 0.0, %v791
      %v793 = vpop.f32.mrf.mxu0
      %794 = vmatprep.mubr.f32.mxu0 0.0
      %795 = vmatmul.mubr.f32.gmra.mxu0 %v690
      %v796 = vpop.f32.mrf.mxu0
      %v797 = vadd.f32 0.0, %v796
      %v798 = vpop.f32.mrf.mxu0
      %799 = vmatprep.mubr.f32.mxu0 0.0
      %800 = vmatmul.mubr.f32.gmra.mxu0 %v691
      %v801 = vpop.f32.mrf.mxu0
      %v802 = vadd.f32 0.0, %v801
      %v803 = vpop.f32.mrf.mxu0
      %804 = vmatprep.mubr.f32.mxu0 0.0
      %805 = vmatmul.mubr.f32.gmra.mxu0 %v692
      %v806 = vpop.f32.mrf.mxu0
      %v807 = vadd.f32 0.0, %v806
      %v808 = vpop.f32.mrf.mxu0
      %809 = vdwg.mxu0
      %v810 = vadd.f32 %v679, %v777
      %v811 = vadd.f32 %v680, %v782
      %v812 = vadd.f32 %v681, %v787
      %v813 = vadd.f32 %v682, %v792
      %v814 = vadd.f32 %v683, %v797
      %v815 = vadd.f32 %v684, %v802
      %v816 = vadd.f32 %v685, %v807
      %v817 = vld [vmem:[#allocation2 + $0x9] sm:$0xff]
      %v818 = vld [vmem:[#allocation2 + $0x11] sm:$0xff]
      %v819 = vld [vmem:[#allocation2 + $0x19] sm:$0xff]
      %v820 = vld [vmem:[#allocation2 + $0x21] sm:$0xff]
      %v821 = vld [vmem:[#allocation2 + $0x29] sm:$0xff]
      %v822 = vld [vmem:[#allocation2 + $0x31] sm:$0xff]
      %v823 = vld [vmem:[#allocation2 + $0x39] sm:$0xff]
      %s824 = scalar_lea.vmem %s1, 512
      %v825 = vld [vmem:[%s824] sm:$0xff]
      %v826 = vld [vmem:[%s824 + $0x8] sm:$0xff]
      %v827 = vld [vmem:[%s824 + $0x10] sm:$0xff]
      %v828 = vld [vmem:[%s824 + $0x18] sm:$0xff]
      %v829 = vld [vmem:[%s824 + $0x20] sm:$0xff]
      %v830 = vld [vmem:[%s824 + $0x28] sm:$0xff]
      %v831 = vld [vmem:[%s824 + $0x30] sm:$0xff]
      %v832 = vld [vmem:[%s824 + $0x38] sm:$0xff]
      %v833 = vld [vmem:[%s824 + $0x40] sm:$0xff]
      %v834 = vld [vmem:[%s824 + $0x48] sm:$0xff]
      %v835 = vld [vmem:[%s824 + $0x50] sm:$0xff]
      %v836 = vld [vmem:[%s824 + $0x58] sm:$0xff]
      %v837 = vld [vmem:[%s824 + $0x60] sm:$0xff]
      %v838 = vld [vmem:[%s824 + $0x68] sm:$0xff]
      %v839 = vld [vmem:[%s824 + $0x70] sm:$0xff]
      %v840 = vld [vmem:[%s824 + $0x78] sm:$0xff]
      %841 = vmatprep.subr.mxu0 0.0
      %842 = vmatpush1.msra.mxu0 %v840
      %843 = vmatprep.subr.mxu0 0.0
      %844 = vmatpush1.msra.mxu0 %v839
      %845 = vmatprep.subr.mxu0 0.0
      %846 = vmatpush1.msra.mxu0 %v838
      %847 = vmatprep.subr.mxu0 0.0
      %848 = vmatpush1.msra.mxu0 %v837
      %849 = vmatprep.subr.mxu0 0.0
      %850 = vmatpush1.msra.mxu0 %v836
      %851 = vmatprep.subr.mxu0 0.0
      %852 = vmatpush1.msra.mxu0 %v835
      %853 = vmatprep.subr.mxu0 0.0
      %854 = vmatpush1.msra.mxu0 %v834
      %855 = vmatprep.subr.mxu0 0.0
      %856 = vmatpush1.msra.mxu0 %v833
      %857 = vmatprep.subr.mxu0 0.0
      %858 = vmatpush1.msra.mxu0 %v832
      %859 = vmatprep.subr.mxu0 0.0
      %860 = vmatpush1.msra.mxu0 %v831
      %861 = vmatprep.subr.mxu0 0.0
      %862 = vmatpush1.msra.mxu0 %v830
      %863 = vmatprep.subr.mxu0 0.0
      %864 = vmatpush1.msra.mxu0 %v829
      %865 = vmatprep.subr.mxu0 0.0
      %866 = vmatpush1.msra.mxu0 %v828
      %867 = vmatprep.subr.mxu0 0.0
      %868 = vmatpush1.msra.mxu0 %v827
      %869 = vmatprep.subr.mxu0 0.0
      %870 = vmatpush1.msra.mxu0 %v826
      %871 = vmatprep.subr.mxu0 0.0
      %872 = vmatpush1.msra.mxu0 %v825
      %873 = vmatprep.subr.mxu0 0.0
      %874 = vmatpush2.msra.mxu0 0.0
      %875 = vmatprep.subr.mxu0 0.0
      %876 = vmatpush2.msra.mxu0 0.0
      %877 = vmatprep.subr.mxu0 0.0
      %878 = vmatpush2.msra.mxu0 0.0
      %879 = vmatprep.subr.mxu0 0.0
      %880 = vmatpush2.msra.mxu0 0.0
      %881 = vmatprep.subr.mxu0 0.0
      %882 = vmatpush2.msra.mxu0 0.0
      %883 = vmatprep.subr.mxu0 0.0
      %884 = vmatpush2.msra.mxu0 0.0
      %885 = vmatprep.subr.mxu0 0.0
      %886 = vmatpush2.msra.mxu0 0.0
      %887 = vmatprep.subr.mxu0 0.0
      %888 = vmatpush2.msra.mxu0 0.0
      %889 = vmatprep.subr.mxu0 0.0
      %890 = vmatpush2.msra.mxu0 0.0
      %891 = vmatprep.subr.mxu0 0.0
      %892 = vmatpush2.msra.mxu0 0.0
      %893 = vmatprep.subr.mxu0 0.0
      %894 = vmatpush2.msra.mxu0 0.0
      %895 = vmatprep.subr.mxu0 0.0
      %896 = vmatpush2.msra.mxu0 0.0
      %897 = vmatprep.subr.mxu0 0.0
      %898 = vmatpush2.msra.mxu0 0.0
      %899 = vmatprep.subr.mxu0 0.0
      %900 = vmatpush2.msra.mxu0 0.0
      %901 = vmatprep.subr.mxu0 0.0
      %902 = vmatpush2.msra.mxu0 0.0
      %903 = vmatprep.subr.mxu0 0.0
      %904 = vmatpush2.msra.mxu0 0.0
      %905 = vmatprep.mubr.f32.mxu0 0.0
      %906 = vmatmul.mubr.f32.gmra.mxu0 %v817
      %v907 = vpop.f32.mrf.mxu0
      %v908 = vadd.f32 0.0, %v907
      %v909 = vpop.f32.mrf.mxu0
      %910 = vmatprep.mubr.f32.mxu0 0.0
      %911 = vmatmul.mubr.f32.gmra.mxu0 %v818
      %v912 = vpop.f32.mrf.mxu0
      %v913 = vadd.f32 0.0, %v912
      %v914 = vpop.f32.mrf.mxu0
      %915 = vmatprep.mubr.f32.mxu0 0.0
      %916 = vmatmul.mubr.f32.gmra.mxu0 %v819
      %v917 = vpop.f32.mrf.mxu0
      %v918 = vadd.f32 0.0, %v917
      %v919 = vpop.f32.mrf.mxu0
      %920 = vmatprep.mubr.f32.mxu0 0.0
      %921 = vmatmul.mubr.f32.gmra.mxu0 %v820
      %v922 = vpop.f32.mrf.mxu0
      %v923 = vadd.f32 0.0, %v922
      %v924 = vpop.f32.mrf.mxu0
      %925 = vmatprep.mubr.f32.mxu0 0.0
      %926 = vmatmul.mubr.f32.gmra.mxu0 %v821
      %v927 = vpop.f32.mrf.mxu0
      %v928 = vadd.f32 0.0, %v927
      %v929 = vpop.f32.mrf.mxu0
      %930 = vmatprep.mubr.f32.mxu0 0.0
      %931 = vmatmul.mubr.f32.gmra.mxu0 %v822
      %v932 = vpop.f32.mrf.mxu0
      %v933 = vadd.f32 0.0, %v932
      %v934 = vpop.f32.mrf.mxu0
      %935 = vmatprep.mubr.f32.mxu0 0.0
      %936 = vmatmul.mubr.f32.gmra.mxu0 %v823
      %v937 = vpop.f32.mrf.mxu0
      %v938 = vadd.f32 0.0, %v937
      %v939 = vpop.f32.mrf.mxu0
      %940 = vdwg.mxu0
      %v941 = vadd.f32 %v810, %v908
      %v942 = vadd.f32 %v811, %v913
      %v943 = vadd.f32 %v812, %v918
      %v944 = vadd.f32 %v813, %v923
      %v945 = vadd.f32 %v814, %v928
      %v946 = vadd.f32 %v815, %v933
      %v947 = vadd.f32 %v816, %v938
      %v948 = vld [vmem:[#allocation2 + $0xa] sm:$0xff]
      %v949 = vld [vmem:[#allocation2 + $0x12] sm:$0xff]
      %v950 = vld [vmem:[#allocation2 + $0x1a] sm:$0xff]
      %v951 = vld [vmem:[#allocation2 + $0x22] sm:$0xff]
      %v952 = vld [vmem:[#allocation2 + $0x2a] sm:$0xff]
      %v953 = vld [vmem:[#allocation2 + $0x32] sm:$0xff]
      %v954 = vld [vmem:[#allocation2 + $0x3a] sm:$0xff]
      %s955 = scalar_lea.vmem %s1, 640
      %v956 = vld [vmem:[%s955] sm:$0xff]
      %v957 = vld [vmem:[%s955 + $0x8] sm:$0xff]
      %v958 = vld [vmem:[%s955 + $0x10] sm:$0xff]
      %v959 = vld [vmem:[%s955 + $0x18] sm:$0xff]
      %v960 = vld [vmem:[%s955 + $0x20] sm:$0xff]
      %v961 = vld [vmem:[%s955 + $0x28] sm:$0xff]
      %v962 = vld [vmem:[%s955 + $0x30] sm:$0xff]
      %v963 = vld [vmem:[%s955 + $0x38] sm:$0xff]
      %v964 = vld [vmem:[%s955 + $0x40] sm:$0xff]
      %v965 = vld [vmem:[%s955 + $0x48] sm:$0xff]
      %v966 = vld [vmem:[%s955 + $0x50] sm:$0xff]
      %v967 = vld [vmem:[%s955 + $0x58] sm:$0xff]
      %v968 = vld [vmem:[%s955 + $0x60] sm:$0xff]
      %v969 = vld [vmem:[%s955 + $0x68] sm:$0xff]
      %v970 = vld [vmem:[%s955 + $0x70] sm:$0xff]
      %v971 = vld [vmem:[%s955 + $0x78] sm:$0xff]
      %972 = vmatprep.subr.mxu0 0.0
      %973 = vmatpush1.msra.mxu0 %v971
      %974 = vmatprep.subr.mxu0 0.0
      %975 = vmatpush1.msra.mxu0 %v970
      %976 = vmatprep.subr.mxu0 0.0
      %977 = vmatpush1.msra.mxu0 %v969
      %978 = vmatprep.subr.mxu0 0.0
      %979 = vmatpush1.msra.mxu0 %v968
      %980 = vmatprep.subr.mxu0 0.0
      %981 = vmatpush1.msra.mxu0 %v967
      %982 = vmatprep.subr.mxu0 0.0
      %983 = vmatpush1.msra.mxu0 %v966
      %984 = vmatprep.subr.mxu0 0.0
      %985 = vmatpush1.msra.mxu0 %v965
      %986 = vmatprep.subr.mxu0 0.0
      %987 = vmatpush1.msra.mxu0 %v964
      %988 = vmatprep.subr.mxu0 0.0
      %989 = vmatpush1.msra.mxu0 %v963
      %990 = vmatprep.subr.mxu0 0.0
      %991 = vmatpush1.msra.mxu0 %v962
      %992 = vmatprep.subr.mxu0 0.0
      %993 = vmatpush1.msra.mxu0 %v961
      %994 = vmatprep.subr.mxu0 0.0
      %995 = vmatpush1.msra.mxu0 %v960
      %996 = vmatprep.subr.mxu0 0.0
      %997 = vmatpush1.msra.mxu0 %v959
      %998 = vmatprep.subr.mxu0 0.0
      %999 = vmatpush1.msra.mxu0 %v958
      %1000 = vmatprep.subr.mxu0 0.0
      %1001 = vmatpush1.msra.mxu0 %v957
      %1002 = vmatprep.subr.mxu0 0.0
      %1003 = vmatpush1.msra.mxu0 %v956
      %1004 = vmatprep.subr.mxu0 0.0
      %1005 = vmatpush2.msra.mxu0 0.0
      %1006 = vmatprep.subr.mxu0 0.0
      %1007 = vmatpush2.msra.mxu0 0.0
      %1008 = vmatprep.subr.mxu0 0.0
      %1009 = vmatpush2.msra.mxu0 0.0
      %1010 = vmatprep.subr.mxu0 0.0
      %1011 = vmatpush2.msra.mxu0 0.0
      %1012 = vmatprep.subr.mxu0 0.0
      %1013 = vmatpush2.msra.mxu0 0.0
      %1014 = vmatprep.subr.mxu0 0.0
      %1015 = vmatpush2.msra.mxu0 0.0
      %1016 = vmatprep.subr.mxu0 0.0
      %1017 = vmatpush2.msra.mxu0 0.0
      %1018 = vmatprep.subr.mxu0 0.0
      %1019 = vmatpush2.msra.mxu0 0.0
      %1020 = vmatprep.subr.mxu0 0.0
      %1021 = vmatpush2.msra.mxu0 0.0
      %1022 = vmatprep.subr.mxu0 0.0
      %1023 = vmatpush2.msra.mxu0 0.0
      %1024 = vmatprep.subr.mxu0 0.0
      %1025 = vmatpush2.msra.mxu0 0.0
      %1026 = vmatprep.subr.mxu0 0.0
      %1027 = vmatpush2.msra.mxu0 0.0
      %1028 = vmatprep.subr.mxu0 0.0
      %1029 = vmatpush2.msra.mxu0 0.0
      %1030 = vmatprep.subr.mxu0 0.0
      %1031 = vmatpush2.msra.mxu0 0.0
      %1032 = vmatprep.subr.mxu0 0.0
      %1033 = vmatpush2.msra.mxu0 0.0
      %1034 = vmatprep.subr.mxu0 0.0
      %1035 = vmatpush2.msra.mxu0 0.0
      %1036 = vmatprep.mubr.f32.mxu0 0.0
      %1037 = vmatmul.mubr.f32.gmra.mxu0 %v948
      %v1038 = vpop.f32.mrf.mxu0
      %v1039 = vadd.f32 0.0, %v1038
      %v1040 = vpop.f32.mrf.mxu0
      %1041 = vmatprep.mubr.f32.mxu0 0.0
      %1042 = vmatmul.mubr.f32.gmra.mxu0 %v949
      %v1043 = vpop.f32.mrf.mxu0
      %v1044 = vadd.f32 0.0, %v1043
      %v1045 = vpop.f32.mrf.mxu0
      %1046 = vmatprep.mubr.f32.mxu0 0.0
      %1047 = vmatmul.mubr.f32.gmra.mxu0 %v950
      %v1048 = vpop.f32.mrf.mxu0
      %v1049 = vadd.f32 0.0, %v1048
      %v1050 = vpop.f32.mrf.mxu0
      %1051 = vmatprep.mubr.f32.mxu0 0.0
      %1052 = vmatmul.mubr.f32.gmra.mxu0 %v951
      %v1053 = vpop.f32.mrf.mxu0
      %v1054 = vadd.f32 0.0, %v1053
      %v1055 = vpop.f32.mrf.mxu0
      %1056 = vmatprep.mubr.f32.mxu0 0.0
      %1057 = vmatmul.mubr.f32.gmra.mxu0 %v952
      %v1058 = vpop.f32.mrf.mxu0
      %v1059 = vadd.f32 0.0, %v1058
      %v1060 = vpop.f32.mrf.mxu0
      %1061 = vmatprep.mubr.f32.mxu0 0.0
      %1062 = vmatmul.mubr.f32.gmra.mxu0 %v953
      %v1063 = vpop.f32.mrf.mxu0
      %v1064 = vadd.f32 0.0, %v1063
      %v1065 = vpop.f32.mrf.mxu0
      %1066 = vmatprep.mubr.f32.mxu0 0.0
      %1067 = vmatmul.mubr.f32.gmra.mxu0 %v954
      %v1068 = vpop.f32.mrf.mxu0
      %v1069 = vadd.f32 0.0, %v1068
      %v1070 = vpop.f32.mrf.mxu0
      %1071 = vdwg.mxu0
      %v1072 = vadd.f32 %v941, %v1039
      %v1073 = vadd.f32 %v942, %v1044
      %v1074 = vadd.f32 %v943, %v1049
      %v1075 = vadd.f32 %v944, %v1054
      %v1076 = vadd.f32 %v945, %v1059
      %v1077 = vadd.f32 %v946, %v1064
      %v1078 = vadd.f32 %v947, %v1069
      %v1079 = vld [vmem:[#allocation2 + $0x10] sm:$0xff]
      %v1080 = vld [vmem:[#allocation2 + $0x18] sm:$0xff]
      %v1081 = vld [vmem:[#allocation2 + $0x20] sm:$0xff]
      %v1082 = vld [vmem:[#allocation2 + $0x28] sm:$0xff]
      %v1083 = vld [vmem:[#allocation2 + $0x30] sm:$0xff]
      %v1084 = vld [vmem:[#allocation2 + $0x38] sm:$0xff]
      %v1085 = vld [vmem:[#allocation2 + $0x40] sm:$0xff]
      %s1086 = scalar_lea.vmem %s1, 768
      %v1087 = vld [vmem:[%s1086] sm:$0xff]
      %v1088 = vld [vmem:[%s1086 + $0x8] sm:$0xff]
      %v1089 = vld [vmem:[%s1086 + $0x10] sm:$0xff]
      %v1090 = vld [vmem:[%s1086 + $0x18] sm:$0xff]
      %v1091 = vld [vmem:[%s1086 + $0x20] sm:$0xff]
      %v1092 = vld [vmem:[%s1086 + $0x28] sm:$0xff]
      %v1093 = vld [vmem:[%s1086 + $0x30] sm:$0xff]
      %v1094 = vld [vmem:[%s1086 + $0x38] sm:$0xff]
      %v1095 = vld [vmem:[%s1086 + $0x40] sm:$0xff]
      %v1096 = vld [vmem:[%s1086 + $0x48] sm:$0xff]
      %v1097 = vld [vmem:[%s1086 + $0x50] sm:$0xff]
      %v1098 = vld [vmem:[%s1086 + $0x58] sm:$0xff]
      %v1099 = vld [vmem:[%s1086 + $0x60] sm:$0xff]
      %v1100 = vld [vmem:[%s1086 + $0x68] sm:$0xff]
      %v1101 = vld [vmem:[%s1086 + $0x70] sm:$0xff]
      %v1102 = vld [vmem:[%s1086 + $0x78] sm:$0xff]
      %1103 = vmatprep.subr.mxu0 0.0
      %1104 = vmatpush1.msra.mxu0 %v1102
      %1105 = vmatprep.subr.mxu0 0.0
      %1106 = vmatpush1.msra.mxu0 %v1101
      %1107 = vmatprep.subr.mxu0 0.0
      %1108 = vmatpush1.msra.mxu0 %v1100
      %1109 = vmatprep.subr.mxu0 0.0
      %1110 = vmatpush1.msra.mxu0 %v1099
      %1111 = vmatprep.subr.mxu0 0.0
      %1112 = vmatpush1.msra.mxu0 %v1098
      %1113 = vmatprep.subr.mxu0 0.0
      %1114 = vmatpush1.msra.mxu0 %v1097
      %1115 = vmatprep.subr.mxu0 0.0
      %1116 = vmatpush1.msra.mxu0 %v1096
      %1117 = vmatprep.subr.mxu0 0.0
      %1118 = vmatpush1.msra.mxu0 %v1095
      %1119 = vmatprep.subr.mxu0 0.0
      %1120 = vmatpush1.msra.mxu0 %v1094
      %1121 = vmatprep.subr.mxu0 0.0
      %1122 = vmatpush1.msra.mxu0 %v1093
      %1123 = vmatprep.subr.mxu0 0.0
      %1124 = vmatpush1.msra.mxu0 %v1092
      %1125 = vmatprep.subr.mxu0 0.0
      %1126 = vmatpush1.msra.mxu0 %v1091
      %1127 = vmatprep.subr.mxu0 0.0
      %1128 = vmatpush1.msra.mxu0 %v1090
      %1129 = vmatprep.subr.mxu0 0.0
      %1130 = vmatpush1.msra.mxu0 %v1089
      %1131 = vmatprep.subr.mxu0 0.0
      %1132 = vmatpush1.msra.mxu0 %v1088
      %1133 = vmatprep.subr.mxu0 0.0
      %1134 = vmatpush1.msra.mxu0 %v1087
      %1135 = vmatprep.subr.mxu0 0.0
      %1136 = vmatpush2.msra.mxu0 0.0
      %1137 = vmatprep.subr.mxu0 0.0
      %1138 = vmatpush2.msra.mxu0 0.0
      %1139 = vmatprep.subr.mxu0 0.0
      %1140 = vmatpush2.msra.mxu0 0.0
      %1141 = vmatprep.subr.mxu0 0.0
      %1142 = vmatpush2.msra.mxu0 0.0
      %1143 = vmatprep.subr.mxu0 0.0
      %1144 = vmatpush2.msra.mxu0 0.0
      %1145 = vmatprep.subr.mxu0 0.0
      %1146 = vmatpush2.msra.mxu0 0.0
      %1147 = vmatprep.subr.mxu0 0.0
      %1148 = vmatpush2.msra.mxu0 0.0
      %1149 = vmatprep.subr.mxu0 0.0
      %1150 = vmatpush2.msra.mxu0 0.0
      %1151 = vmatprep.subr.mxu0 0.0
      %1152 = vmatpush2.msra.mxu0 0.0
      %1153 = vmatprep.subr.mxu0 0.0
      %1154 = vmatpush2.msra.mxu0 0.0
      %1155 = vmatprep.subr.mxu0 0.0
      %1156 = vmatpush2.msra.mxu0 0.0
      %1157 = vmatprep.subr.mxu0 0.0
      %1158 = vmatpush2.msra.mxu0 0.0
      %1159 = vmatprep.subr.mxu0 0.0
      %1160 = vmatpush2.msra.mxu0 0.0
      %1161 = vmatprep.subr.mxu0 0.0
      %1162 = vmatpush2.msra.mxu0 0.0
      %1163 = vmatprep.subr.mxu0 0.0
      %1164 = vmatpush2.msra.mxu0 0.0
      %1165 = vmatprep.subr.mxu0 0.0
      %1166 = vmatpush2.msra.mxu0 0.0
      %1167 = vmatprep.mubr.f32.mxu0 0.0
      %1168 = vmatmul.mubr.f32.gmra.mxu0 %v1079
      %v1169 = vpop.f32.mrf.mxu0
      %v1170 = vadd.f32 0.0, %v1169
      %v1171 = vpop.f32.mrf.mxu0
      %1172 = vmatprep.mubr.f32.mxu0 0.0
      %1173 = vmatmul.mubr.f32.gmra.mxu0 %v1080
      %v1174 = vpop.f32.mrf.mxu0
      %v1175 = vadd.f32 0.0, %v1174
      %v1176 = vpop.f32.mrf.mxu0
      %1177 = vmatprep.mubr.f32.mxu0 0.0
      %1178 = vmatmul.mubr.f32.gmra.mxu0 %v1081
      %v1179 = vpop.f32.mrf.mxu0
      %v1180 = vadd.f32 0.0, %v1179
      %v1181 = vpop.f32.mrf.mxu0
      %1182 = vmatprep.mubr.f32.mxu0 0.0
      %1183 = vmatmul.mubr.f32.gmra.mxu0 %v1082
      %v1184 = vpop.f32.mrf.mxu0
      %v1185 = vadd.f32 0.0, %v1184
      %v1186 = vpop.f32.mrf.mxu0
      %1187 = vmatprep.mubr.f32.mxu0 0.0
      %1188 = vmatmul.mubr.f32.gmra.mxu0 %v1083
      %v1189 = vpop.f32.mrf.mxu0
      %v1190 = vadd.f32 0.0, %v1189
      %v1191 = vpop.f32.mrf.mxu0
      %1192 = vmatprep.mubr.f32.mxu0 0.0
      %1193 = vmatmul.mubr.f32.gmra.mxu0 %v1084
      %v1194 = vpop.f32.mrf.mxu0
      %v1195 = vadd.f32 0.0, %v1194
      %v1196 = vpop.f32.mrf.mxu0
      %1197 = vmatprep.mubr.f32.mxu0 0.0
      %1198 = vmatmul.mubr.f32.gmra.mxu0 %v1085
      %v1199 = vpop.f32.mrf.mxu0
      %v1200 = vadd.f32 0.0, %v1199
      %v1201 = vpop.f32.mrf.mxu0
      %1202 = vdwg.mxu0
      %v1203 = vadd.f32 %v1072, %v1170
      %v1204 = vadd.f32 %v1073, %v1175
      %v1205 = vadd.f32 %v1074, %v1180
      %v1206 = vadd.f32 %v1075, %v1185
      %v1207 = vadd.f32 %v1076, %v1190
      %v1208 = vadd.f32 %v1077, %v1195
      %v1209 = vadd.f32 %v1078, %v1200
      %v1210 = vld [vmem:[#allocation2 + $0x11] sm:$0xff]
      %v1211 = vld [vmem:[#allocation2 + $0x19] sm:$0xff]
      %v1212 = vld [vmem:[#allocation2 + $0x21] sm:$0xff]
      %v1213 = vld [vmem:[#allocation2 + $0x29] sm:$0xff]
      %v1214 = vld [vmem:[#allocation2 + $0x31] sm:$0xff]
      %v1215 = vld [vmem:[#allocation2 + $0x39] sm:$0xff]
      %v1216 = vld [vmem:[#allocation2 + $0x41] sm:$0xff]
      %s1217 = scalar_lea.vmem %s1, 896
      %v1218 = vld [vmem:[%s1217] sm:$0xff]
      %v1219 = vld [vmem:[%s1217 + $0x8] sm:$0xff]
      %v1220 = vld [vmem:[%s1217 + $0x10] sm:$0xff]
      %v1221 = vld [vmem:[%s1217 + $0x18] sm:$0xff]
      %v1222 = vld [vmem:[%s1217 + $0x20] sm:$0xff]
      %v1223 = vld [vmem:[%s1217 + $0x28] sm:$0xff]
      %v1224 = vld [vmem:[%s1217 + $0x30] sm:$0xff]
      %v1225 = vld [vmem:[%s1217 + $0x38] sm:$0xff]
      %v1226 = vld [vmem:[%s1217 + $0x40] sm:$0xff]
      %v1227 = vld [vmem:[%s1217 + $0x48] sm:$0xff]
      %v1228 = vld [vmem:[%s1217 + $0x50] sm:$0xff]
      %v1229 = vld [vmem:[%s1217 + $0x58] sm:$0xff]
      %v1230 = vld [vmem:[%s1217 + $0x60] sm:$0xff]
      %v1231 = vld [vmem:[%s1217 + $0x68] sm:$0xff]
      %v1232 = vld [vmem:[%s1217 + $0x70] sm:$0xff]
      %v1233 = vld [vmem:[%s1217 + $0x78] sm:$0xff]
      %1234 = vmatprep.subr.mxu0 0.0
      %1235 = vmatpush1.msra.mxu0 %v1233
      %1236 = vmatprep.subr.mxu0 0.0
      %1237 = vmatpush1.msra.mxu0 %v1232
      %1238 = vmatprep.subr.mxu0 0.0
      %1239 = vmatpush1.msra.mxu0 %v1231
      %1240 = vmatprep.subr.mxu0 0.0
      %1241 = vmatpush1.msra.mxu0 %v1230
      %1242 = vmatprep.subr.mxu0 0.0
      %1243 = vmatpush1.msra.mxu0 %v1229
      %1244 = vmatprep.subr.mxu0 0.0
      %1245 = vmatpush1.msra.mxu0 %v1228
      %1246 = vmatprep.subr.mxu0 0.0
      %1247 = vmatpush1.msra.mxu0 %v1227
      %1248 = vmatprep.subr.mxu0 0.0
      %1249 = vmatpush1.msra.mxu0 %v1226
      %1250 = vmatprep.subr.mxu0 0.0
      %1251 = vmatpush1.msra.mxu0 %v1225
      %1252 = vmatprep.subr.mxu0 0.0
      %1253 = vmatpush1.msra.mxu0 %v1224
      %1254 = vmatprep.subr.mxu0 0.0
      %1255 = vmatpush1.msra.mxu0 %v1223
      %1256 = vmatprep.subr.mxu0 0.0
      %1257 = vmatpush1.msra.mxu0 %v1222
      %1258 = vmatprep.subr.mxu0 0.0
      %1259 = vmatpush1.msra.mxu0 %v1221
      %1260 = vmatprep.subr.mxu0 0.0
      %1261 = vmatpush1.msra.mxu0 %v1220
      %1262 = vmatprep.subr.mxu0 0.0
      %1263 = vmatpush1.msra.mxu0 %v1219
      %1264 = vmatprep.subr.mxu0 0.0
      %1265 = vmatpush1.msra.mxu0 %v1218
      %1266 = vmatprep.subr.mxu0 0.0
      %1267 = vmatpush2.msra.mxu0 0.0
      %1268 = vmatprep.subr.mxu0 0.0
      %1269 = vmatpush2.msra.mxu0 0.0
      %1270 = vmatprep.subr.mxu0 0.0
      %1271 = vmatpush2.msra.mxu0 0.0
      %1272 = vmatprep.subr.mxu0 0.0
      %1273 = vmatpush2.msra.mxu0 0.0
      %1274 = vmatprep.subr.mxu0 0.0
      %1275 = vmatpush2.msra.mxu0 0.0
      %1276 = vmatprep.subr.mxu0 0.0
      %1277 = vmatpush2.msra.mxu0 0.0
      %1278 = vmatprep.subr.mxu0 0.0
      %1279 = vmatpush2.msra.mxu0 0.0
      %1280 = vmatprep.subr.mxu0 0.0
      %1281 = vmatpush2.msra.mxu0 0.0
      %1282 = vmatprep.subr.mxu0 0.0
      %1283 = vmatpush2.msra.mxu0 0.0
      %1284 = vmatprep.subr.mxu0 0.0
      %1285 = vmatpush2.msra.mxu0 0.0
      %1286 = vmatprep.subr.mxu0 0.0
      %1287 = vmatpush2.msra.mxu0 0.0
      %1288 = vmatprep.subr.mxu0 0.0
      %1289 = vmatpush2.msra.mxu0 0.0
      %1290 = vmatprep.subr.mxu0 0.0
      %1291 = vmatpush2.msra.mxu0 0.0
      %1292 = vmatprep.subr.mxu0 0.0
      %1293 = vmatpush2.msra.mxu0 0.0
      %1294 = vmatprep.subr.mxu0 0.0
      %1295 = vmatpush2.msra.mxu0 0.0
      %1296 = vmatprep.subr.mxu0 0.0
      %1297 = vmatpush2.msra.mxu0 0.0
      %1298 = vmatprep.mubr.f32.mxu0 0.0
      %1299 = vmatmul.mubr.f32.gmra.mxu0 %v1210
      %v1300 = vpop.f32.mrf.mxu0
      %v1301 = vadd.f32 0.0, %v1300
      %v1302 = vpop.f32.mrf.mxu0
      %1303 = vmatprep.mubr.f32.mxu0 0.0
      %1304 = vmatmul.mubr.f32.gmra.mxu0 %v1211
      %v1305 = vpop.f32.mrf.mxu0
      %v1306 = vadd.f32 0.0, %v1305
      %v1307 = vpop.f32.mrf.mxu0
      %1308 = vmatprep.mubr.f32.mxu0 0.0
      %1309 = vmatmul.mubr.f32.gmra.mxu0 %v1212
      %v1310 = vpop.f32.mrf.mxu0
      %v1311 = vadd.f32 0.0, %v1310
      %v1312 = vpop.f32.mrf.mxu0
      %1313 = vmatprep.mubr.f32.mxu0 0.0
      %1314 = vmatmul.mubr.f32.gmra.mxu0 %v1213
      %v1315 = vpop.f32.mrf.mxu0
      %v1316 = vadd.f32 0.0, %v1315
      %v1317 = vpop.f32.mrf.mxu0
      %1318 = vmatprep.mubr.f32.mxu0 0.0
      %1319 = vmatmul.mubr.f32.gmra.mxu0 %v1214
      %v1320 = vpop.f32.mrf.mxu0
      %v1321 = vadd.f32 0.0, %v1320
      %v1322 = vpop.f32.mrf.mxu0
      %1323 = vmatprep.mubr.f32.mxu0 0.0
      %1324 = vmatmul.mubr.f32.gmra.mxu0 %v1215
      %v1325 = vpop.f32.mrf.mxu0
      %v1326 = vadd.f32 0.0, %v1325
      %v1327 = vpop.f32.mrf.mxu0
      %1328 = vmatprep.mubr.f32.mxu0 0.0
      %1329 = vmatmul.mubr.f32.gmra.mxu0 %v1216
      %v1330 = vpop.f32.mrf.mxu0
      %v1331 = vadd.f32 0.0, %v1330
      %v1332 = vpop.f32.mrf.mxu0
      %1333 = vdwg.mxu0
      %v1334 = vadd.f32 %v1203, %v1301
      %v1335 = vadd.f32 %v1204, %v1306
      %v1336 = vadd.f32 %v1205, %v1311
      %v1337 = vadd.f32 %v1206, %v1316
      %v1338 = vadd.f32 %v1207, %v1321
      %v1339 = vadd.f32 %v1208, %v1326
      %v1340 = vadd.f32 %v1209, %v1331
      %v1341 = vld [vmem:[#allocation2 + $0x12] sm:$0xff]
      %v1342 = vld [vmem:[#allocation2 + $0x1a] sm:$0xff]
      %v1343 = vld [vmem:[#allocation2 + $0x22] sm:$0xff]
      %v1344 = vld [vmem:[#allocation2 + $0x2a] sm:$0xff]
      %v1345 = vld [vmem:[#allocation2 + $0x32] sm:$0xff]
      %v1346 = vld [vmem:[#allocation2 + $0x3a] sm:$0xff]
      %v1347 = vld [vmem:[#allocation2 + $0x42] sm:$0xff]
      %s1348 = scalar_lea.vmem %s1, 1024
      %v1349 = vld [vmem:[%s1348] sm:$0xff]
      %v1350 = vld [vmem:[%s1348 + $0x8] sm:$0xff]
      %v1351 = vld [vmem:[%s1348 + $0x10] sm:$0xff]
      %v1352 = vld [vmem:[%s1348 + $0x18] sm:$0xff]
      %v1353 = vld [vmem:[%s1348 + $0x20] sm:$0xff]
      %v1354 = vld [vmem:[%s1348 + $0x28] sm:$0xff]
      %v1355 = vld [vmem:[%s1348 + $0x30] sm:$0xff]
      %v1356 = vld [vmem:[%s1348 + $0x38] sm:$0xff]
      %v1357 = vld [vmem:[%s1348 + $0x40] sm:$0xff]
      %v1358 = vld [vmem:[%s1348 + $0x48] sm:$0xff]
      %v1359 = vld [vmem:[%s1348 + $0x50] sm:$0xff]
      %v1360 = vld [vmem:[%s1348 + $0x58] sm:$0xff]
      %v1361 = vld [vmem:[%s1348 + $0x60] sm:$0xff]
      %v1362 = vld [vmem:[%s1348 + $0x68] sm:$0xff]
      %v1363 = vld [vmem:[%s1348 + $0x70] sm:$0xff]
      %v1364 = vld [vmem:[%s1348 + $0x78] sm:$0xff]
      %1365 = vmatprep.subr.mxu0 0.0
      %1366 = vmatpush1.msra.mxu0 %v1364
      %1367 = vmatprep.subr.mxu0 0.0
      %1368 = vmatpush1.msra.mxu0 %v1363
      %1369 = vmatprep.subr.mxu0 0.0
      %1370 = vmatpush1.msra.mxu0 %v1362
      %1371 = vmatprep.subr.mxu0 0.0
      %1372 = vmatpush1.msra.mxu0 %v1361
      %1373 = vmatprep.subr.mxu0 0.0
      %1374 = vmatpush1.msra.mxu0 %v1360
      %1375 = vmatprep.subr.mxu0 0.0
      %1376 = vmatpush1.msra.mxu0 %v1359
      %1377 = vmatprep.subr.mxu0 0.0
      %1378 = vmatpush1.msra.mxu0 %v1358
      %1379 = vmatprep.subr.mxu0 0.0
      %1380 = vmatpush1.msra.mxu0 %v1357
      %1381 = vmatprep.subr.mxu0 0.0
      %1382 = vmatpush1.msra.mxu0 %v1356
      %1383 = vmatprep.subr.mxu0 0.0
      %1384 = vmatpush1.msra.mxu0 %v1355
      %1385 = vmatprep.subr.mxu0 0.0
      %1386 = vmatpush1.msra.mxu0 %v1354
      %1387 = vmatprep.subr.mxu0 0.0
      %1388 = vmatpush1.msra.mxu0 %v1353
      %1389 = vmatprep.subr.mxu0 0.0
      %1390 = vmatpush1.msra.mxu0 %v1352
      %1391 = vmatprep.subr.mxu0 0.0
      %1392 = vmatpush1.msra.mxu0 %v1351
      %1393 = vmatprep.subr.mxu0 0.0
      %1394 = vmatpush1.msra.mxu0 %v1350
      %1395 = vmatprep.subr.mxu0 0.0
      %1396 = vmatpush1.msra.mxu0 %v1349
      %1397 = vmatprep.subr.mxu0 0.0
      %1398 = vmatpush2.msra.mxu0 0.0
      %1399 = vmatprep.subr.mxu0 0.0
      %1400 = vmatpush2.msra.mxu0 0.0
      %1401 = vmatprep.subr.mxu0 0.0
      %1402 = vmatpush2.msra.mxu0 0.0
      %1403 = vmatprep.subr.mxu0 0.0
      %1404 = vmatpush2.msra.mxu0 0.0
      %1405 = vmatprep.subr.mxu0 0.0
      %1406 = vmatpush2.msra.mxu0 0.0
      %1407 = vmatprep.subr.mxu0 0.0
      %1408 = vmatpush2.msra.mxu0 0.0
      %1409 = vmatprep.subr.mxu0 0.0
      %1410 = vmatpush2.msra.mxu0 0.0
      %1411 = vmatprep.subr.mxu0 0.0
      %1412 = vmatpush2.msra.mxu0 0.0
      %1413 = vmatprep.subr.mxu0 0.0
      %1414 = vmatpush2.msra.mxu0 0.0
      %1415 = vmatprep.subr.mxu0 0.0
      %1416 = vmatpush2.msra.mxu0 0.0
      %1417 = vmatprep.subr.mxu0 0.0
      %1418 = vmatpush2.msra.mxu0 0.0
      %1419 = vmatprep.subr.mxu0 0.0
      %1420 = vmatpush2.msra.mxu0 0.0
      %1421 = vmatprep.subr.mxu0 0.0
      %1422 = vmatpush2.msra.mxu0 0.0
      %1423 = vmatprep.subr.mxu0 0.0
      %1424 = vmatpush2.msra.mxu0 0.0
      %1425 = vmatprep.subr.mxu0 0.0
      %1426 = vmatpush2.msra.mxu0 0.0
      %1427 = vmatprep.subr.mxu0 0.0
      %1428 = vmatpush2.msra.mxu0 0.0
      %1429 = vmatprep.mubr.f32.mxu0 0.0
      %1430 = vmatmul.mubr.f32.gmra.mxu0 %v1341
      %v1431 = vpop.f32.mrf.mxu0
      %v1432 = vadd.f32 0.0, %v1431
      %v1433 = vpop.f32.mrf.mxu0
      %1434 = vmatprep.mubr.f32.mxu0 0.0
      %1435 = vmatmul.mubr.f32.gmra.mxu0 %v1342
      %v1436 = vpop.f32.mrf.mxu0
      %v1437 = vadd.f32 0.0, %v1436
      %v1438 = vpop.f32.mrf.mxu0
      %1439 = vmatprep.mubr.f32.mxu0 0.0
      %1440 = vmatmul.mubr.f32.gmra.mxu0 %v1343
      %v1441 = vpop.f32.mrf.mxu0
      %v1442 = vadd.f32 0.0, %v1441
      %v1443 = vpop.f32.mrf.mxu0
      %1444 = vmatprep.mubr.f32.mxu0 0.0
      %1445 = vmatmul.mubr.f32.gmra.mxu0 %v1344
      %v1446 = vpop.f32.mrf.mxu0
      %v1447 = vadd.f32 0.0, %v1446
      %v1448 = vpop.f32.mrf.mxu0
      %1449 = vmatprep.mubr.f32.mxu0 0.0
      %1450 = vmatmul.mubr.f32.gmra.mxu0 %v1345
      %v1451 = vpop.f32.mrf.mxu0
      %v1452 = vadd.f32 0.0, %v1451
      %v1453 = vpop.f32.mrf.mxu0
      %1454 = vmatprep.mubr.f32.mxu0 0.0
      %1455 = vmatmul.mubr.f32.gmra.mxu0 %v1346
      %v1456 = vpop.f32.mrf.mxu0
      %v1457 = vadd.f32 0.0, %v1456
      %v1458 = vpop.f32.mrf.mxu0
      %1459 = vmatprep.mubr.f32.mxu0 0.0
      %1460 = vmatmul.mubr.f32.gmra.mxu0 %v1347
      %v1461 = vpop.f32.mrf.mxu0
      %v1462 = vadd.f32 0.0, %v1461
      %v1463 = vpop.f32.mrf.mxu0
      %1464 = vdwg.mxu0
      %v1465 = vadd.f32 %v1334, %v1432
      %v1466 = vadd.f32 %v1335, %v1437
      %v1467 = vadd.f32 %v1336, %v1442
      %v1468 = vadd.f32 %v1337, %v1447
      %v1469 = vadd.f32 %v1338, %v1452
      %v1470 = vadd.f32 %v1339, %v1457
      %v1471 = vadd.f32 %v1340, %v1462
      %v1472 = vld [vmem:[%s2] sm:$0x1]
      %v1474 = vlaneseq
      %v1475 = vshrl.u32 %v1474, 7
      %v1476 = vsub.s32 0, %v1475
      %v1477 = vrot.slane %v1472, %v1476
      %v1479 = vadd.f32 %v1465, %v1477
      %v1480 = vadd.f32 %v1466, %v1477
      %v1481 = vadd.f32 %v1467, %v1477
      %v1482 = vadd.f32 %v1468, %v1477
      %v1483 = vadd.f32 %v1469, %v1477
      %v1484 = vadd.f32 %v1470, %v1477
      %v1485 = vadd.f32 %v1471, %v1477
      %v1486 = vmax.f32 %v1479, 0.0
      %v1487 = vmax.f32 %v1480, 0.0
      %v1488 = vmax.f32 %v1481, 0.0
      %v1489 = vmax.f32 %v1482, 0.0
      %v1490 = vmax.f32 %v1483, 0.0
      %v1491 = vmax.f32 %v1484, 0.0
      %v1492 = vmax.f32 %v1485, 0.0
      %1493 = vst [vmem:[#allocation3] sm:$0xff] %v1486
      %1494 = vst [vmem:[#allocation3 + $0x8] sm:$0xff] %v1487
      %1495 = vst [vmem:[#allocation3 + $0x10] sm:$0xff] %v1488
      %1496 = vst [vmem:[#allocation3 + $0x18] sm:$0xff] %v1489
      %1497 = vst [vmem:[#allocation3 + $0x20] sm:$0xff] %v1490
      %1498 = vst [vmem:[#allocation3 + $0x28] sm:$0xff] %v1491
      %1499 = vst [vmem:[#allocation3 + $0x30] sm:$0xff] %v1492
      %v1500 = vld [vmem:[#allocation3] sm:$0xff]
      %v1501 = vld [vmem:[#allocation3 + $0x8] sm:$0xff]
      %v1502 = vld [vmem:[#allocation3 + $0x10] sm:$0xff]
      %v1503 = vld [vmem:[#allocation3 + $0x18] sm:$0xff]
      %v1504 = vld [vmem:[%s3] sm:$0xff]
      %v1505 = vld [vmem:[%s3 + $0x8] sm:$0xff]
      %v1506 = vld [vmem:[%s3 + $0x10] sm:$0xff]
      %v1507 = vld [vmem:[%s3 + $0x18] sm:$0xff]
      %v1508 = vld [vmem:[%s3 + $0x20] sm:$0xff]
      %v1509 = vld [vmem:[%s3 + $0x28] sm:$0xff]
      %v1510 = vld [vmem:[%s3 + $0x30] sm:$0xff]
      %v1511 = vld [vmem:[%s3 + $0x38] sm:$0xff]
      %v1512 = vld [vmem:[%s3 + $0x40] sm:$0xff]
      %v1513 = vld [vmem:[%s3 + $0x48] sm:$0xff]
      %v1514 = vld [vmem:[%s3 + $0x50] sm:$0xff]
      %v1515 = vld [vmem:[%s3 + $0x58] sm:$0xff]
      %v1516 = vld [vmem:[%s3 + $0x60] sm:$0xff]
      %v1517 = vld [vmem:[%s3 + $0x68] sm:$0xff]
      %v1518 = vld [vmem:[%s3 + $0x70] sm:$0xff]
      %v1519 = vld [vmem:[%s3 + $0x78] sm:$0xff]
      %v1520 = vld [vmem:[#allocation3 + $0x1] sm:$0xff]
      %v1521 = vld [vmem:[#allocation3 + $0x9] sm:$0xff]
      %v1522 = vld [vmem:[#allocation3 + $0x11] sm:$0xff]
      %v1523 = vld [vmem:[#allocation3 + $0x19] sm:$0xff]
      %s1524 = scalar_lea.vmem %s3, 128
      %v1525 = vld [vmem:[%s1524] sm:$0xff]
      %v1526 = vld [vmem:[%s1524 + $0x8] sm:$0xff]
      %v1527 = vld [vmem:[%s1524 + $0x10] sm:$0xff]
      %v1528 = vld [vmem:[%s1524 + $0x18] sm:$0xff]
      %v1529 = vld [vmem:[%s1524 + $0x20] sm:$0xff]
      %v1530 = vld [vmem:[%s1524 + $0x28] sm:$0xff]
      %v1531 = vld [vmem:[%s1524 + $0x30] sm:$0xff]
      %v1532 = vld [vmem:[%s1524 + $0x38] sm:$0xff]
      %v1533 = vld [vmem:[%s1524 + $0x40] sm:$0xff]
      %v1534 = vld [vmem:[%s1524 + $0x48] sm:$0xff]
      %v1535 = vld [vmem:[%s1524 + $0x50] sm:$0xff]
      %v1536 = vld [vmem:[%s1524 + $0x58] sm:$0xff]
      %v1537 = vld [vmem:[%s1524 + $0x60] sm:$0xff]
      %v1538 = vld [vmem:[%s1524 + $0x68] sm:$0xff]
      %v1539 = vld [vmem:[%s1524 + $0x70] sm:$0xff]
      %v1540 = vld [vmem:[%s1524 + $0x78] sm:$0xff]
      %1541 = vmatprep.subr.mxu0 0.0
      %1542 = vmatpush1.msra.mxu0 %v1540
      %1543 = vmatprep.subr.mxu0 0.0
      %1544 = vmatpush1.msra.mxu0 %v1539
      %1545 = vmatprep.subr.mxu0 0.0
      %1546 = vmatpush1.msra.mxu0 %v1538
      %1547 = vmatprep.subr.mxu0 0.0
      %1548 = vmatpush1.msra.mxu0 %v1537
      %1549 = vmatprep.subr.mxu0 0.0
      %1550 = vmatpush1.msra.mxu0 %v1536
      %1551 = vmatprep.subr.mxu0 0.0
      %1552 = vmatpush1.msra.mxu0 %v1535
      %1553 = vmatprep.subr.mxu0 0.0
      %1554 = vmatpush1.msra.mxu0 %v1534
      %1555 = vmatprep.subr.mxu0 0.0
      %1556 = vmatpush1.msra.mxu0 %v1533
      %1557 = vmatprep.subr.mxu0 0.0
      %1558 = vmatpush1.msra.mxu0 %v1532
      %1559 = vmatprep.subr.mxu0 0.0
      %1560 = vmatpush1.msra.mxu0 %v1531
      %1561 = vmatprep.subr.mxu0 0.0
      %1562 = vmatpush1.msra.mxu0 %v1530
      %1563 = vmatprep.subr.mxu0 0.0
      %1564 = vmatpush1.msra.mxu0 %v1529
      %1565 = vmatprep.subr.mxu0 0.0
      %1566 = vmatpush1.msra.mxu0 %v1528
      %1567 = vmatprep.subr.mxu0 0.0
      %1568 = vmatpush1.msra.mxu0 %v1527
      %1569 = vmatprep.subr.mxu0 0.0
      %1570 = vmatpush1.msra.mxu0 %v1526
      %1571 = vmatprep.subr.mxu0 0.0
      %1572 = vmatpush1.msra.mxu0 %v1525
      %1573 = vmatprep.subr.mxu0 0.0
      %1574 = vmatpush2.msra.mxu0 0.0
      %1575 = vmatprep.subr.mxu0 0.0
      %1576 = vmatpush2.msra.mxu0 0.0
      %1577 = vmatprep.subr.mxu0 0.0
      %1578 = vmatpush2.msra.mxu0 0.0
      %1579 = vmatprep.subr.mxu0 0.0
      %1580 = vmatpush2.msra.mxu0 0.0
      %1581 = vmatprep.subr.mxu0 0.0
      %1582 = vmatpush2.msra.mxu0 0.0
      %1583 = vmatprep.subr.mxu0 0.0
      %1584 = vmatpush2.msra.mxu0 0.0
      %1585 = vmatprep.subr.mxu0 0.0
      %1586 = vmatpush2.msra.mxu0 0.0
      %1587 = vmatprep.subr.mxu0 0.0
      %1588 = vmatpush2.msra.mxu0 0.0
      %1589 = vmatprep.subr.mxu0 0.0
      %1590 = vmatpush2.msra.mxu0 0.0
      %1591 = vmatprep.subr.mxu0 0.0
      %1592 = vmatpush2.msra.mxu0 0.0
      %1593 = vmatprep.subr.mxu0 0.0
      %1594 = vmatpush2.msra.mxu0 0.0
      %1595 = vmatprep.subr.mxu0 0.0
      %1596 = vmatpush2.msra.mxu0 0.0
      %1597 = vmatprep.subr.mxu0 0.0
      %1598 = vmatpush2.msra.mxu0 0.0
      %1599 = vmatprep.subr.mxu0 0.0
      %1600 = vmatpush2.msra.mxu0 0.0
      %1601 = vmatprep.subr.mxu0 0.0
      %1602 = vmatpush2.msra.mxu0 0.0
      %1603 = vmatprep.subr.mxu0 0.0
      %1604 = vmatpush2.msra.mxu0 0.0
      %1605 = vmatprep.mubr.f32.mxu0 0.0
      %1606 = vmatmul.mubr.f32.gmra.mxu0 %v1520
      %v1607 = vpop.f32.mrf.mxu0
      %v1608 = vadd.f32 0.0, %v1607
      %v1609 = vpop.f32.mrf.mxu0
      %1610 = vmatprep.mubr.f32.mxu0 0.0
      %1611 = vmatmul.mubr.f32.gmra.mxu0 %v1521
      %v1612 = vpop.f32.mrf.mxu0
      %v1613 = vadd.f32 0.0, %v1612
      %v1614 = vpop.f32.mrf.mxu0
      %1615 = vmatprep.mubr.f32.mxu0 0.0
      %1616 = vmatmul.mubr.f32.gmra.mxu0 %v1522
      %v1617 = vpop.f32.mrf.mxu0
      %v1618 = vadd.f32 0.0, %v1617
      %v1619 = vpop.f32.mrf.mxu0
      %1620 = vmatprep.mubr.f32.mxu0 0.0
      %1621 = vmatmul.mubr.f32.gmra.mxu0 %v1523
      %v1622 = vpop.f32.mrf.mxu0
      %v1623 = vadd.f32 0.0, %v1622
      %v1624 = vpop.f32.mrf.mxu0
      %1625 = vdwg.mxu0
      %1626 = vmatprep.subr.mxu0 0.0
      %1627 = vmatpush1.msra.mxu0 %v1519
      %1628 = vmatprep.subr.mxu0 0.0
      %1629 = vmatpush1.msra.mxu0 %v1518
      %1630 = vmatprep.subr.mxu0 0.0
      %1631 = vmatpush1.msra.mxu0 %v1517
      %1632 = vmatprep.subr.mxu0 0.0
      %1633 = vmatpush1.msra.mxu0 %v1516
      %1634 = vmatprep.subr.mxu0 0.0
      %1635 = vmatpush1.msra.mxu0 %v1515
      %1636 = vmatprep.subr.mxu0 0.0
      %1637 = vmatpush1.msra.mxu0 %v1514
      %1638 = vmatprep.subr.mxu0 0.0
      %1639 = vmatpush1.msra.mxu0 %v1513
      %1640 = vmatprep.subr.mxu0 0.0
      %1641 = vmatpush1.msra.mxu0 %v1512
      %1642 = vmatprep.subr.mxu0 0.0
      %1643 = vmatpush1.msra.mxu0 %v1511
      %1644 = vmatprep.subr.mxu0 0.0
      %1645 = vmatpush1.msra.mxu0 %v1510
      %1646 = vmatprep.subr.mxu0 0.0
      %1647 = vmatpush1.msra.mxu0 %v1509
      %1648 = vmatprep.subr.mxu0 0.0
      %1649 = vmatpush1.msra.mxu0 %v1508
      %1650 = vmatprep.subr.mxu0 0.0
      %1651 = vmatpush1.msra.mxu0 %v1507
      %1652 = vmatprep.subr.mxu0 0.0
      %1653 = vmatpush1.msra.mxu0 %v1506
      %1654 = vmatprep.subr.mxu0 0.0
      %1655 = vmatpush1.msra.mxu0 %v1505
      %1656 = vmatprep.subr.mxu0 0.0
      %1657 = vmatpush1.msra.mxu0 %v1504
      %1658 = vmatprep.subr.mxu0 0.0
      %1659 = vmatpush2.msra.mxu0 0.0
      %1660 = vmatprep.subr.mxu0 0.0
      %1661 = vmatpush2.msra.mxu0 0.0
      %1662 = vmatprep.subr.mxu0 0.0
      %1663 = vmatpush2.msra.mxu0 0.0
      %1664 = vmatprep.subr.mxu0 0.0
      %1665 = vmatpush2.msra.mxu0 0.0
      %1666 = vmatprep.subr.mxu0 0.0
      %1667 = vmatpush2.msra.mxu0 0.0
      %1668 = vmatprep.subr.mxu0 0.0
      %1669 = vmatpush2.msra.mxu0 0.0
      %1670 = vmatprep.subr.mxu0 0.0
      %1671 = vmatpush2.msra.mxu0 0.0
      %1672 = vmatprep.subr.mxu0 0.0
      %1673 = vmatpush2.msra.mxu0 0.0
      %1674 = vmatprep.subr.mxu0 0.0
      %1675 = vmatpush2.msra.mxu0 0.0
      %1676 = vmatprep.subr.mxu0 0.0
      %1677 = vmatpush2.msra.mxu0 0.0
      %1678 = vmatprep.subr.mxu0 0.0
      %1679 = vmatpush2.msra.mxu0 0.0
      %1680 = vmatprep.subr.mxu0 0.0
      %1681 = vmatpush2.msra.mxu0 0.0
      %1682 = vmatprep.subr.mxu0 0.0
      %1683 = vmatpush2.msra.mxu0 0.0
      %1684 = vmatprep.subr.mxu0 0.0
      %1685 = vmatpush2.msra.mxu0 0.0
      %1686 = vmatprep.subr.mxu0 0.0
      %1687 = vmatpush2.msra.mxu0 0.0
      %1688 = vmatprep.subr.mxu0 0.0
      %1689 = vmatpush2.msra.mxu0 0.0
      %1690 = vmatprep.mubr.f32.mxu0 0.0
      %1691 = vmatmul.mubr.f32.gmra.mxu0 %v1500
      %v1692 = vpop.f32.mrf.mxu0
      %v1693 = vadd.f32 %v1608, %v1692
      %v1694 = vpop.f32.mrf.mxu0
      %1695 = vmatprep.mubr.f32.mxu0 0.0
      %1696 = vmatmul.mubr.f32.gmra.mxu0 %v1501
      %v1697 = vpop.f32.mrf.mxu0
      %v1698 = vadd.f32 %v1613, %v1697
      %v1699 = vpop.f32.mrf.mxu0
      %1700 = vmatprep.mubr.f32.mxu0 0.0
      %1701 = vmatmul.mubr.f32.gmra.mxu0 %v1502
      %v1702 = vpop.f32.mrf.mxu0
      %v1703 = vadd.f32 %v1618, %v1702
      %v1704 = vpop.f32.mrf.mxu0
      %1705 = vmatprep.mubr.f32.mxu0 0.0
      %1706 = vmatmul.mubr.f32.gmra.mxu0 %v1503
      %v1707 = vpop.f32.mrf.mxu0
      %v1708 = vadd.f32 %v1623, %v1707
      %v1709 = vpop.f32.mrf.mxu0
      %1710 = vdwg.mxu0
      %v1711 = vld [vmem:[#allocation3 + $0x2] sm:$0xff]
      %v1712 = vld [vmem:[#allocation3 + $0xa] sm:$0xff]
      %v1713 = vld [vmem:[#allocation3 + $0x12] sm:$0xff]
      %v1714 = vld [vmem:[#allocation3 + $0x1a] sm:$0xff]
      %s1715 = scalar_lea.vmem %s3, 256
      %v1716 = vld [vmem:[%s1715] sm:$0xff]
      %v1717 = vld [vmem:[%s1715 + $0x8] sm:$0xff]
      %v1718 = vld [vmem:[%s1715 + $0x10] sm:$0xff]
      %v1719 = vld [vmem:[%s1715 + $0x18] sm:$0xff]
      %v1720 = vld [vmem:[%s1715 + $0x20] sm:$0xff]
      %v1721 = vld [vmem:[%s1715 + $0x28] sm:$0xff]
      %v1722 = vld [vmem:[%s1715 + $0x30] sm:$0xff]
      %v1723 = vld [vmem:[%s1715 + $0x38] sm:$0xff]
      %v1724 = vld [vmem:[%s1715 + $0x40] sm:$0xff]
      %v1725 = vld [vmem:[%s1715 + $0x48] sm:$0xff]
      %v1726 = vld [vmem:[%s1715 + $0x50] sm:$0xff]
      %v1727 = vld [vmem:[%s1715 + $0x58] sm:$0xff]
      %v1728 = vld [vmem:[%s1715 + $0x60] sm:$0xff]
      %v1729 = vld [vmem:[%s1715 + $0x68] sm:$0xff]
      %v1730 = vld [vmem:[%s1715 + $0x70] sm:$0xff]
      %v1731 = vld [vmem:[%s1715 + $0x78] sm:$0xff]
      %1732 = vmatprep.subr.mxu0 0.0
      %1733 = vmatpush1.msra.mxu0 %v1731
      %1734 = vmatprep.subr.mxu0 0.0
      %1735 = vmatpush1.msra.mxu0 %v1730
      %1736 = vmatprep.subr.mxu0 0.0
      %1737 = vmatpush1.msra.mxu0 %v1729
      %1738 = vmatprep.subr.mxu0 0.0
      %1739 = vmatpush1.msra.mxu0 %v1728
      %1740 = vmatprep.subr.mxu0 0.0
      %1741 = vmatpush1.msra.mxu0 %v1727
      %1742 = vmatprep.subr.mxu0 0.0
      %1743 = vmatpush1.msra.mxu0 %v1726
      %1744 = vmatprep.subr.mxu0 0.0
      %1745 = vmatpush1.msra.mxu0 %v1725
      %1746 = vmatprep.subr.mxu0 0.0
      %1747 = vmatpush1.msra.mxu0 %v1724
      %1748 = vmatprep.subr.mxu0 0.0
      %1749 = vmatpush1.msra.mxu0 %v1723
      %1750 = vmatprep.subr.mxu0 0.0
      %1751 = vmatpush1.msra.mxu0 %v1722
      %1752 = vmatprep.subr.mxu0 0.0
      %1753 = vmatpush1.msra.mxu0 %v1721
      %1754 = vmatprep.subr.mxu0 0.0
      %1755 = vmatpush1.msra.mxu0 %v1720
      %1756 = vmatprep.subr.mxu0 0.0
      %1757 = vmatpush1.msra.mxu0 %v1719
      %1758 = vmatprep.subr.mxu0 0.0
      %1759 = vmatpush1.msra.mxu0 %v1718
      %1760 = vmatprep.subr.mxu0 0.0
      %1761 = vmatpush1.msra.mxu0 %v1717
      %1762 = vmatprep.subr.mxu0 0.0
      %1763 = vmatpush1.msra.mxu0 %v1716
      %1764 = vmatprep.subr.mxu0 0.0
      %1765 = vmatpush2.msra.mxu0 0.0
      %1766 = vmatprep.subr.mxu0 0.0
      %1767 = vmatpush2.msra.mxu0 0.0
      %1768 = vmatprep.subr.mxu0 0.0
      %1769 = vmatpush2.msra.mxu0 0.0
      %1770 = vmatprep.subr.mxu0 0.0
      %1771 = vmatpush2.msra.mxu0 0.0
      %1772 = vmatprep.subr.mxu0 0.0
      %1773 = vmatpush2.msra.mxu0 0.0
      %1774 = vmatprep.subr.mxu0 0.0
      %1775 = vmatpush2.msra.mxu0 0.0
      %1776 = vmatprep.subr.mxu0 0.0
      %1777 = vmatpush2.msra.mxu0 0.0
      %1778 = vmatprep.subr.mxu0 0.0
      %1779 = vmatpush2.msra.mxu0 0.0
      %1780 = vmatprep.subr.mxu0 0.0
      %1781 = vmatpush2.msra.mxu0 0.0
      %1782 = vmatprep.subr.mxu0 0.0
      %1783 = vmatpush2.msra.mxu0 0.0
      %1784 = vmatprep.subr.mxu0 0.0
      %1785 = vmatpush2.msra.mxu0 0.0
      %1786 = vmatprep.subr.mxu0 0.0
      %1787 = vmatpush2.msra.mxu0 0.0
      %1788 = vmatprep.subr.mxu0 0.0
      %1789 = vmatpush2.msra.mxu0 0.0
      %1790 = vmatprep.subr.mxu0 0.0
      %1791 = vmatpush2.msra.mxu0 0.0
      %1792 = vmatprep.subr.mxu0 0.0
      %1793 = vmatpush2.msra.mxu0 0.0
      %1794 = vmatprep.subr.mxu0 0.0
      %1795 = vmatpush2.msra.mxu0 0.0
      %1796 = vmatprep.mubr.f32.mxu0 0.0
      %1797 = vmatmul.mubr.f32.gmra.mxu0 %v1711
      %v1798 = vpop.f32.mrf.mxu0
      %v1799 = vadd.f32 0.0, %v1798
      %v1800 = vpop.f32.mrf.mxu0
      %1801 = vmatprep.mubr.f32.mxu0 0.0
      %1802 = vmatmul.mubr.f32.gmra.mxu0 %v1712
      %v1803 = vpop.f32.mrf.mxu0
      %v1804 = vadd.f32 0.0, %v1803
      %v1805 = vpop.f32.mrf.mxu0
      %1806 = vmatprep.mubr.f32.mxu0 0.0
      %1807 = vmatmul.mubr.f32.gmra.mxu0 %v1713
      %v1808 = vpop.f32.mrf.mxu0
      %v1809 = vadd.f32 0.0, %v1808
      %v1810 = vpop.f32.mrf.mxu0
      %1811 = vmatprep.mubr.f32.mxu0 0.0
      %1812 = vmatmul.mubr.f32.gmra.mxu0 %v1714
      %v1813 = vpop.f32.mrf.mxu0
      %v1814 = vadd.f32 0.0, %v1813
      %v1815 = vpop.f32.mrf.mxu0
      %1816 = vdwg.mxu0
      %v1817 = vadd.f32 %v1693, %v1799
      %v1818 = vadd.f32 %v1698, %v1804
      %v1819 = vadd.f32 %v1703, %v1809
      %v1820 = vadd.f32 %v1708, %v1814
      %v1821 = vld [vmem:[#allocation3 + $0x8] sm:$0xff]
      %v1822 = vld [vmem:[#allocation3 + $0x10] sm:$0xff]
      %v1823 = vld [vmem:[#allocation3 + $0x18] sm:$0xff]
      %v1824 = vld [vmem:[#allocation3 + $0x20] sm:$0xff]
      %s1825 = scalar_lea.vmem %s3, 384
      %v1826 = vld [vmem:[%s1825] sm:$0xff]
      %v1827 = vld [vmem:[%s1825 + $0x8] sm:$0xff]
      %v1828 = vld [vmem:[%s1825 + $0x10] sm:$0xff]
      %v1829 = vld [vmem:[%s1825 + $0x18] sm:$0xff]
      %v1830 = vld [vmem:[%s1825 + $0x20] sm:$0xff]
      %v1831 = vld [vmem:[%s1825 + $0x28] sm:$0xff]
      %v1832 = vld [vmem:[%s1825 + $0x30] sm:$0xff]
      %v1833 = vld [vmem:[%s1825 + $0x38] sm:$0xff]
      %v1834 = vld [vmem:[%s1825 + $0x40] sm:$0xff]
      %v1835 = vld [vmem:[%s1825 + $0x48] sm:$0xff]
      %v1836 = vld [vmem:[%s1825 + $0x50] sm:$0xff]
      %v1837 = vld [vmem:[%s1825 + $0x58] sm:$0xff]
      %v1838 = vld [vmem:[%s1825 + $0x60] sm:$0xff]
      %v1839 = vld [vmem:[%s1825 + $0x68] sm:$0xff]
      %v1840 = vld [vmem:[%s1825 + $0x70] sm:$0xff]
      %v1841 = vld [vmem:[%s1825 + $0x78] sm:$0xff]
      %1842 = vmatprep.subr.mxu0 0.0
      %1843 = vmatpush1.msra.mxu0 %v1841
      %1844 = vmatprep.subr.mxu0 0.0
      %1845 = vmatpush1.msra.mxu0 %v1840
      %1846 = vmatprep.subr.mxu0 0.0
      %1847 = vmatpush1.msra.mxu0 %v1839
      %1848 = vmatprep.subr.mxu0 0.0
      %1849 = vmatpush1.msra.mxu0 %v1838
      %1850 = vmatprep.subr.mxu0 0.0
      %1851 = vmatpush1.msra.mxu0 %v1837
      %1852 = vmatprep.subr.mxu0 0.0
      %1853 = vmatpush1.msra.mxu0 %v1836
      %1854 = vmatprep.subr.mxu0 0.0
      %1855 = vmatpush1.msra.mxu0 %v1835
      %1856 = vmatprep.subr.mxu0 0.0
      %1857 = vmatpush1.msra.mxu0 %v1834
      %1858 = vmatprep.subr.mxu0 0.0
      %1859 = vmatpush1.msra.mxu0 %v1833
      %1860 = vmatprep.subr.mxu0 0.0
      %1861 = vmatpush1.msra.mxu0 %v1832
      %1862 = vmatprep.subr.mxu0 0.0
      %1863 = vmatpush1.msra.mxu0 %v1831
      %1864 = vmatprep.subr.mxu0 0.0
      %1865 = vmatpush1.msra.mxu0 %v1830
      %1866 = vmatprep.subr.mxu0 0.0
      %1867 = vmatpush1.msra.mxu0 %v1829
      %1868 = vmatprep.subr.mxu0 0.0
      %1869 = vmatpush1.msra.mxu0 %v1828
      %1870 = vmatprep.subr.mxu0 0.0
      %1871 = vmatpush1.msra.mxu0 %v1827
      %1872 = vmatprep.subr.mxu0 0.0
      %1873 = vmatpush1.msra.mxu0 %v1826
      %1874 = vmatprep.subr.mxu0 0.0
      %1875 = vmatpush2.msra.mxu0 0.0
      %1876 = vmatprep.subr.mxu0 0.0
      %1877 = vmatpush2.msra.mxu0 0.0
      %1878 = vmatprep.subr.mxu0 0.0
      %1879 = vmatpush2.msra.mxu0 0.0
      %1880 = vmatprep.subr.mxu0 0.0
      %1881 = vmatpush2.msra.mxu0 0.0
      %1882 = vmatprep.subr.mxu0 0.0
      %1883 = vmatpush2.msra.mxu0 0.0
      %1884 = vmatprep.subr.mxu0 0.0
      %1885 = vmatpush2.msra.mxu0 0.0
      %1886 = vmatprep.subr.mxu0 0.0
      %1887 = vmatpush2.msra.mxu0 0.0
      %1888 = vmatprep.subr.mxu0 0.0
      %1889 = vmatpush2.msra.mxu0 0.0
      %1890 = vmatprep.subr.mxu0 0.0
      %1891 = vmatpush2.msra.mxu0 0.0
      %1892 = vmatprep.subr.mxu0 0.0
      %1893 = vmatpush2.msra.mxu0 0.0
      %1894 = vmatprep.subr.mxu0 0.0
      %1895 = vmatpush2.msra.mxu0 0.0
      %1896 = vmatprep.subr.mxu0 0.0
      %1897 = vmatpush2.msra.mxu0 0.0
      %1898 = vmatprep.subr.mxu0 0.0
      %1899 = vmatpush2.msra.mxu0 0.0
      %1900 = vmatprep.subr.mxu0 0.0
      %1901 = vmatpush2.msra.mxu0 0.0
      %1902 = vmatprep.subr.mxu0 0.0
      %1903 = vmatpush2.msra.mxu0 0.0
      %1904 = vmatprep.subr.mxu0 0.0
      %1905 = vmatpush2.msra.mxu0 0.0
      %1906 = vmatprep.mubr.f32.mxu0 0.0
      %1907 = vmatmul.mubr.f32.gmra.mxu0 %v1821
      %v1908 = vpop.f32.mrf.mxu0
      %v1909 = vadd.f32 0.0, %v1908
      %v1910 = vpop.f32.mrf.mxu0
      %1911 = vmatprep.mubr.f32.mxu0 0.0
      %1912 = vmatmul.mubr.f32.gmra.mxu0 %v1822
      %v1913 = vpop.f32.mrf.mxu0
      %v1914 = vadd.f32 0.0, %v1913
      %v1915 = vpop.f32.mrf.mxu0
      %1916 = vmatprep.mubr.f32.mxu0 0.0
      %1917 = vmatmul.mubr.f32.gmra.mxu0 %v1823
      %v1918 = vpop.f32.mrf.mxu0
      %v1919 = vadd.f32 0.0, %v1918
      %v1920 = vpop.f32.mrf.mxu0
      %1921 = vmatprep.mubr.f32.mxu0 0.0
      %1922 = vmatmul.mubr.f32.gmra.mxu0 %v1824
      %v1923 = vpop.f32.mrf.mxu0
      %v1924 = vadd.f32 0.0, %v1923
      %v1925 = vpop.f32.mrf.mxu0
      %1926 = vdwg.mxu0
      %v1927 = vadd.f32 %v1817, %v1909
      %v1928 = vadd.f32 %v1818, %v1914
      %v1929 = vadd.f32 %v1819, %v1919
      %v1930 = vadd.f32 %v1820, %v1924
      %v1931 = vld [vmem:[#allocation3 + $0x9] sm:$0xff]
      %v1932 = vld [vmem:[#allocation3 + $0x11] sm:$0xff]
      %v1933 = vld [vmem:[#allocation3 + $0x19] sm:$0xff]
      %v1934 = vld [vmem:[#allocation3 + $0x21] sm:$0xff]
      %s1935 = scalar_lea.vmem %s3, 512
      %v1936 = vld [vmem:[%s1935] sm:$0xff]
      %v1937 = vld [vmem:[%s1935 + $0x8] sm:$0xff]
      %v1938 = vld [vmem:[%s1935 + $0x10] sm:$0xff]
      %v1939 = vld [vmem:[%s1935 + $0x18] sm:$0xff]
      %v1940 = vld [vmem:[%s1935 + $0x20] sm:$0xff]
      %v1941 = vld [vmem:[%s1935 + $0x28] sm:$0xff]
      %v1942 = vld [vmem:[%s1935 + $0x30] sm:$0xff]
      %v1943 = vld [vmem:[%s1935 + $0x38] sm:$0xff]
      %v1944 = vld [vmem:[%s1935 + $0x40] sm:$0xff]
      %v1945 = vld [vmem:[%s1935 + $0x48] sm:$0xff]
      %v1946 = vld [vmem:[%s1935 + $0x50] sm:$0xff]
      %v1947 = vld [vmem:[%s1935 + $0x58] sm:$0xff]
      %v1948 = vld [vmem:[%s1935 + $0x60] sm:$0xff]
      %v1949 = vld [vmem:[%s1935 + $0x68] sm:$0xff]
      %v1950 = vld [vmem:[%s1935 + $0x70] sm:$0xff]
      %v1951 = vld [vmem:[%s1935 + $0x78] sm:$0xff]
      %1952 = vmatprep.subr.mxu0 0.0
      %1953 = vmatpush1.msra.mxu0 %v1951
      %1954 = vmatprep.subr.mxu0 0.0
      %1955 = vmatpush1.msra.mxu0 %v1950
      %1956 = vmatprep.subr.mxu0 0.0
      %1957 = vmatpush1.msra.mxu0 %v1949
      %1958 = vmatprep.subr.mxu0 0.0
      %1959 = vmatpush1.msra.mxu0 %v1948
      %1960 = vmatprep.subr.mxu0 0.0
      %1961 = vmatpush1.msra.mxu0 %v1947
      %1962 = vmatprep.subr.mxu0 0.0
      %1963 = vmatpush1.msra.mxu0 %v1946
      %1964 = vmatprep.subr.mxu0 0.0
      %1965 = vmatpush1.msra.mxu0 %v1945
      %1966 = vmatprep.subr.mxu0 0.0
      %1967 = vmatpush1.msra.mxu0 %v1944
      %1968 = vmatprep.subr.mxu0 0.0
      %1969 = vmatpush1.msra.mxu0 %v1943
      %1970 = vmatprep.subr.mxu0 0.0
      %1971 = vmatpush1.msra.mxu0 %v1942
      %1972 = vmatprep.subr.mxu0 0.0
      %1973 = vmatpush1.msra.mxu0 %v1941
      %1974 = vmatprep.subr.mxu0 0.0
      %1975 = vmatpush1.msra.mxu0 %v1940
      %1976 = vmatprep.subr.mxu0 0.0
      %1977 = vmatpush1.msra.mxu0 %v1939
      %1978 = vmatprep.subr.mxu0 0.0
      %1979 = vmatpush1.msra.mxu0 %v1938
      %1980 = vmatprep.subr.mxu0 0.0
      %1981 = vmatpush1.msra.mxu0 %v1937
      %1982 = vmatprep.subr.mxu0 0.0
      %1983 = vmatpush1.msra.mxu0 %v1936
      %1984 = vmatprep.subr.mxu0 0.0
      %1985 = vmatpush2.msra.mxu0 0.0
      %1986 = vmatprep.subr.mxu0 0.0
      %1987 = vmatpush2.msra.mxu0 0.0
      %1988 = vmatprep.subr.mxu0 0.0
      %1989 = vmatpush2.msra.mxu0 0.0
      %1990 = vmatprep.subr.mxu0 0.0
      %1991 = vmatpush2.msra.mxu0 0.0
      %1992 = vmatprep.subr.mxu0 0.0
      %1993 = vmatpush2.msra.mxu0 0.0
      %1994 = vmatprep.subr.mxu0 0.0
      %1995 = vmatpush2.msra.mxu0 0.0
      %1996 = vmatprep.subr.mxu0 0.0
      %1997 = vmatpush2.msra.mxu0 0.0
      %1998 = vmatprep.subr.mxu0 0.0
      %1999 = vmatpush2.msra.mxu0 0.0
      %2000 = vmatprep.subr.mxu0 0.0
      %2001 = vmatpush2.msra.mxu0 0.0
      %2002 = vmatprep.subr.mxu0 0.0
      %2003 = vmatpush2.msra.mxu0 0.0
      %2004 = vmatprep.subr.mxu0 0.0
      %2005 = vmatpush2.msra.mxu0 0.0
      %2006 = vmatprep.subr.mxu0 0.0
      %2007 = vmatpush2.msra.mxu0 0.0
      %2008 = vmatprep.subr.mxu0 0.0
      %2009 = vmatpush2.msra.mxu0 0.0
      %2010 = vmatprep.subr.mxu0 0.0
      %2011 = vmatpush2.msra.mxu0 0.0
      %2012 = vmatprep.subr.mxu0 0.0
      %2013 = vmatpush2.msra.mxu0 0.0
      %2014 = vmatprep.subr.mxu0 0.0
      %2015 = vmatpush2.msra.mxu0 0.0
      %2016 = vmatprep.mubr.f32.mxu0 0.0
      %2017 = vmatmul.mubr.f32.gmra.mxu0 %v1931
      %v2018 = vpop.f32.mrf.mxu0
      %v2019 = vadd.f32 0.0, %v2018
      %v2020 = vpop.f32.mrf.mxu0
      %2021 = vmatprep.mubr.f32.mxu0 0.0
      %2022 = vmatmul.mubr.f32.gmra.mxu0 %v1932
      %v2023 = vpop.f32.mrf.mxu0
      %v2024 = vadd.f32 0.0, %v2023
      %v2025 = vpop.f32.mrf.mxu0
      %2026 = vmatprep.mubr.f32.mxu0 0.0
      %2027 = vmatmul.mubr.f32.gmra.mxu0 %v1933
      %v2028 = vpop.f32.mrf.mxu0
      %v2029 = vadd.f32 0.0, %v2028
      %v2030 = vpop.f32.mrf.mxu0
      %2031 = vmatprep.mubr.f32.mxu0 0.0
      %2032 = vmatmul.mubr.f32.gmra.mxu0 %v1934
      %v2033 = vpop.f32.mrf.mxu0
      %v2034 = vadd.f32 0.0, %v2033
      %v2035 = vpop.f32.mrf.mxu0
      %2036 = vdwg.mxu0
      %v2037 = vadd.f32 %v1927, %v2019
      %v2038 = vadd.f32 %v1928, %v2024
      %v2039 = vadd.f32 %v1929, %v2029
      %v2040 = vadd.f32 %v1930, %v2034
      %v2041 = vld [vmem:[#allocation3 + $0xa] sm:$0xff]
      %v2042 = vld [vmem:[#allocation3 + $0x12] sm:$0xff]
      %v2043 = vld [vmem:[#allocation3 + $0x1a] sm:$0xff]
      %v2044 = vld [vmem:[#allocation3 + $0x22] sm:$0xff]
      %s2045 = scalar_lea.vmem %s3, 640
      %v2046 = vld [vmem:[%s2045] sm:$0xff]
      %v2047 = vld [vmem:[%s2045 + $0x8] sm:$0xff]
      %v2048 = vld [vmem:[%s2045 + $0x10] sm:$0xff]
      %v2049 = vld [vmem:[%s2045 + $0x18] sm:$0xff]
      %v2050 = vld [vmem:[%s2045 + $0x20] sm:$0xff]
      %v2051 = vld [vmem:[%s2045 + $0x28] sm:$0xff]
      %v2052 = vld [vmem:[%s2045 + $0x30] sm:$0xff]
      %v2053 = vld [vmem:[%s2045 + $0x38] sm:$0xff]
      %v2054 = vld [vmem:[%s2045 + $0x40] sm:$0xff]
      %v2055 = vld [vmem:[%s2045 + $0x48] sm:$0xff]
      %v2056 = vld [vmem:[%s2045 + $0x50] sm:$0xff]
      %v2057 = vld [vmem:[%s2045 + $0x58] sm:$0xff]
      %v2058 = vld [vmem:[%s2045 + $0x60] sm:$0xff]
      %v2059 = vld [vmem:[%s2045 + $0x68] sm:$0xff]
      %v2060 = vld [vmem:[%s2045 + $0x70] sm:$0xff]
      %v2061 = vld [vmem:[%s2045 + $0x78] sm:$0xff]
      %2062 = vmatprep.subr.mxu0 0.0
      %2063 = vmatpush1.msra.mxu0 %v2061
      %2064 = vmatprep.subr.mxu0 0.0
      %2065 = vmatpush1.msra.mxu0 %v2060
      %2066 = vmatprep.subr.mxu0 0.0
      %2067 = vmatpush1.msra.mxu0 %v2059
      %2068 = vmatprep.subr.mxu0 0.0
      %2069 = vmatpush1.msra.mxu0 %v2058
      %2070 = vmatprep.subr.mxu0 0.0
      %2071 = vmatpush1.msra.mxu0 %v2057
      %2072 = vmatprep.subr.mxu0 0.0
      %2073 = vmatpush1.msra.mxu0 %v2056
      %2074 = vmatprep.subr.mxu0 0.0
      %2075 = vmatpush1.msra.mxu0 %v2055
      %2076 = vmatprep.subr.mxu0 0.0
      %2077 = vmatpush1.msra.mxu0 %v2054
      %2078 = vmatprep.subr.mxu0 0.0
      %2079 = vmatpush1.msra.mxu0 %v2053
      %2080 = vmatprep.subr.mxu0 0.0
      %2081 = vmatpush1.msra.mxu0 %v2052
      %2082 = vmatprep.subr.mxu0 0.0
      %2083 = vmatpush1.msra.mxu0 %v2051
      %2084 = vmatprep.subr.mxu0 0.0
      %2085 = vmatpush1.msra.mxu0 %v2050
      %2086 = vmatprep.subr.mxu0 0.0
      %2087 = vmatpush1.msra.mxu0 %v2049
      %2088 = vmatprep.subr.mxu0 0.0
      %2089 = vmatpush1.msra.mxu0 %v2048
      %2090 = vmatprep.subr.mxu0 0.0
      %2091 = vmatpush1.msra.mxu0 %v2047
      %2092 = vmatprep.subr.mxu0 0.0
      %2093 = vmatpush1.msra.mxu0 %v2046
      %2094 = vmatprep.subr.mxu0 0.0
      %2095 = vmatpush2.msra.mxu0 0.0
      %2096 = vmatprep.subr.mxu0 0.0
      %2097 = vmatpush2.msra.mxu0 0.0
      %2098 = vmatprep.subr.mxu0 0.0
      %2099 = vmatpush2.msra.mxu0 0.0
      %2100 = vmatprep.subr.mxu0 0.0
      %2101 = vmatpush2.msra.mxu0 0.0
      %2102 = vmatprep.subr.mxu0 0.0
      %2103 = vmatpush2.msra.mxu0 0.0
      %2104 = vmatprep.subr.mxu0 0.0
      %2105 = vmatpush2.msra.mxu0 0.0
      %2106 = vmatprep.subr.mxu0 0.0
      %2107 = vmatpush2.msra.mxu0 0.0
      %2108 = vmatprep.subr.mxu0 0.0
      %2109 = vmatpush2.msra.mxu0 0.0
      %2110 = vmatprep.subr.mxu0 0.0
      %2111 = vmatpush2.msra.mxu0 0.0
      %2112 = vmatprep.subr.mxu0 0.0
      %2113 = vmatpush2.msra.mxu0 0.0
      %2114 = vmatprep.subr.mxu0 0.0
      %2115 = vmatpush2.msra.mxu0 0.0
      %2116 = vmatprep.subr.mxu0 0.0
      %2117 = vmatpush2.msra.mxu0 0.0
      %2118 = vmatprep.subr.mxu0 0.0
      %2119 = vmatpush2.msra.mxu0 0.0
      %2120 = vmatprep.subr.mxu0 0.0
      %2121 = vmatpush2.msra.mxu0 0.0
      %2122 = vmatprep.subr.mxu0 0.0
      %2123 = vmatpush2.msra.mxu0 0.0
      %2124 = vmatprep.subr.mxu0 0.0
      %2125 = vmatpush2.msra.mxu0 0.0
      %2126 = vmatprep.mubr.f32.mxu0 0.0
      %2127 = vmatmul.mubr.f32.gmra.mxu0 %v2041
      %v2128 = vpop.f32.mrf.mxu0
      %v2129 = vadd.f32 0.0, %v2128
      %v2130 = vpop.f32.mrf.mxu0
      %2131 = vmatprep.mubr.f32.mxu0 0.0
      %2132 = vmatmul.mubr.f32.gmra.mxu0 %v2042
      %v2133 = vpop.f32.mrf.mxu0
      %v2134 = vadd.f32 0.0, %v2133
      %v2135 = vpop.f32.mrf.mxu0
      %2136 = vmatprep.mubr.f32.mxu0 0.0
      %2137 = vmatmul.mubr.f32.gmra.mxu0 %v2043
      %v2138 = vpop.f32.mrf.mxu0
      %v2139 = vadd.f32 0.0, %v2138
      %v2140 = vpop.f32.mrf.mxu0
      %2141 = vmatprep.mubr.f32.mxu0 0.0
      %2142 = vmatmul.mubr.f32.gmra.mxu0 %v2044
      %v2143 = vpop.f32.mrf.mxu0
      %v2144 = vadd.f32 0.0, %v2143
      %v2145 = vpop.f32.mrf.mxu0
      %2146 = vdwg.mxu0
      %v2147 = vadd.f32 %v2037, %v2129
      %v2148 = vadd.f32 %v2038, %v2134
      %v2149 = vadd.f32 %v2039, %v2139
      %v2150 = vadd.f32 %v2040, %v2144
      %v2151 = vld [vmem:[#allocation3 + $0x10] sm:$0xff]
      %v2152 = vld [vmem:[#allocation3 + $0x18] sm:$0xff]
      %v2153 = vld [vmem:[#allocation3 + $0x20] sm:$0xff]
      %v2154 = vld [vmem:[#allocation3 + $0x28] sm:$0xff]
      %s2155 = scalar_lea.vmem %s3, 768
      %v2156 = vld [vmem:[%s2155] sm:$0xff]
      %v2157 = vld [vmem:[%s2155 + $0x8] sm:$0xff]
      %v2158 = vld [vmem:[%s2155 + $0x10] sm:$0xff]
      %v2159 = vld [vmem:[%s2155 + $0x18] sm:$0xff]
      %v2160 = vld [vmem:[%s2155 + $0x20] sm:$0xff]
      %v2161 = vld [vmem:[%s2155 + $0x28] sm:$0xff]
      %v2162 = vld [vmem:[%s2155 + $0x30] sm:$0xff]
      %v2163 = vld [vmem:[%s2155 + $0x38] sm:$0xff]
      %v2164 = vld [vmem:[%s2155 + $0x40] sm:$0xff]
      %v2165 = vld [vmem:[%s2155 + $0x48] sm:$0xff]
      %v2166 = vld [vmem:[%s2155 + $0x50] sm:$0xff]
      %v2167 = vld [vmem:[%s2155 + $0x58] sm:$0xff]
      %v2168 = vld [vmem:[%s2155 + $0x60] sm:$0xff]
      %v2169 = vld [vmem:[%s2155 + $0x68] sm:$0xff]
      %v2170 = vld [vmem:[%s2155 + $0x70] sm:$0xff]
      %v2171 = vld [vmem:[%s2155 + $0x78] sm:$0xff]
      %2172 = vmatprep.subr.mxu0 0.0
      %2173 = vmatpush1.msra.mxu0 %v2171
      %2174 = vmatprep.subr.mxu0 0.0
      %2175 = vmatpush1.msra.mxu0 %v2170
      %2176 = vmatprep.subr.mxu0 0.0
      %2177 = vmatpush1.msra.mxu0 %v2169
      %2178 = vmatprep.subr.mxu0 0.0
      %2179 = vmatpush1.msra.mxu0 %v2168
      %2180 = vmatprep.subr.mxu0 0.0
      %2181 = vmatpush1.msra.mxu0 %v2167
      %2182 = vmatprep.subr.mxu0 0.0
      %2183 = vmatpush1.msra.mxu0 %v2166
      %2184 = vmatprep.subr.mxu0 0.0
      %2185 = vmatpush1.msra.mxu0 %v2165
      %2186 = vmatprep.subr.mxu0 0.0
      %2187 = vmatpush1.msra.mxu0 %v2164
      %2188 = vmatprep.subr.mxu0 0.0
      %2189 = vmatpush1.msra.mxu0 %v2163
      %2190 = vmatprep.subr.mxu0 0.0
      %2191 = vmatpush1.msra.mxu0 %v2162
      %2192 = vmatprep.subr.mxu0 0.0
      %2193 = vmatpush1.msra.mxu0 %v2161
      %2194 = vmatprep.subr.mxu0 0.0
      %2195 = vmatpush1.msra.mxu0 %v2160
      %2196 = vmatprep.subr.mxu0 0.0
      %2197 = vmatpush1.msra.mxu0 %v2159
      %2198 = vmatprep.subr.mxu0 0.0
      %2199 = vmatpush1.msra.mxu0 %v2158
      %2200 = vmatprep.subr.mxu0 0.0
      %2201 = vmatpush1.msra.mxu0 %v2157
      %2202 = vmatprep.subr.mxu0 0.0
      %2203 = vmatpush1.msra.mxu0 %v2156
      %2204 = vmatprep.subr.mxu0 0.0
      %2205 = vmatpush2.msra.mxu0 0.0
      %2206 = vmatprep.subr.mxu0 0.0
      %2207 = vmatpush2.msra.mxu0 0.0
      %2208 = vmatprep.subr.mxu0 0.0
      %2209 = vmatpush2.msra.mxu0 0.0
      %2210 = vmatprep.subr.mxu0 0.0
      %2211 = vmatpush2.msra.mxu0 0.0
      %2212 = vmatprep.subr.mxu0 0.0
      %2213 = vmatpush2.msra.mxu0 0.0
      %2214 = vmatprep.subr.mxu0 0.0
      %2215 = vmatpush2.msra.mxu0 0.0
      %2216 = vmatprep.subr.mxu0 0.0
      %2217 = vmatpush2.msra.mxu0 0.0
      %2218 = vmatprep.subr.mxu0 0.0
      %2219 = vmatpush2.msra.mxu0 0.0
      %2220 = vmatprep.subr.mxu0 0.0
      %2221 = vmatpush2.msra.mxu0 0.0
      %2222 = vmatprep.subr.mxu0 0.0
      %2223 = vmatpush2.msra.mxu0 0.0
      %2224 = vmatprep.subr.mxu0 0.0
      %2225 = vmatpush2.msra.mxu0 0.0
      %2226 = vmatprep.subr.mxu0 0.0
      %2227 = vmatpush2.msra.mxu0 0.0
      %2228 = vmatprep.subr.mxu0 0.0
      %2229 = vmatpush2.msra.mxu0 0.0
      %2230 = vmatprep.subr.mxu0 0.0
      %2231 = vmatpush2.msra.mxu0 0.0
      %2232 = vmatprep.subr.mxu0 0.0
      %2233 = vmatpush2.msra.mxu0 0.0
      %2234 = vmatprep.subr.mxu0 0.0
      %2235 = vmatpush2.msra.mxu0 0.0
      %2236 = vmatprep.mubr.f32.mxu0 0.0
      %2237 = vmatmul.mubr.f32.gmra.mxu0 %v2151
      %v2238 = vpop.f32.mrf.mxu0
      %v2239 = vadd.f32 0.0, %v2238
      %v2240 = vpop.f32.mrf.mxu0
      %2241 = vmatprep.mubr.f32.mxu0 0.0
      %2242 = vmatmul.mubr.f32.gmra.mxu0 %v2152
      %v2243 = vpop.f32.mrf.mxu0
      %v2244 = vadd.f32 0.0, %v2243
      %v2245 = vpop.f32.mrf.mxu0
      %2246 = vmatprep.mubr.f32.mxu0 0.0
      %2247 = vmatmul.mubr.f32.gmra.mxu0 %v2153
      %v2248 = vpop.f32.mrf.mxu0
      %v2249 = vadd.f32 0.0, %v2248
      %v2250 = vpop.f32.mrf.mxu0
      %2251 = vmatprep.mubr.f32.mxu0 0.0
      %2252 = vmatmul.mubr.f32.gmra.mxu0 %v2154
      %v2253 = vpop.f32.mrf.mxu0
      %v2254 = vadd.f32 0.0, %v2253
      %v2255 = vpop.f32.mrf.mxu0
      %2256 = vdwg.mxu0
      %v2257 = vadd.f32 %v2147, %v2239
      %v2258 = vadd.f32 %v2148, %v2244
      %v2259 = vadd.f32 %v2149, %v2249
      %v2260 = vadd.f32 %v2150, %v2254
      %v2261 = vld [vmem:[#allocation3 + $0x11] sm:$0xff]
      %v2262 = vld [vmem:[#allocation3 + $0x19] sm:$0xff]
      %v2263 = vld [vmem:[#allocation3 + $0x21] sm:$0xff]
      %v2264 = vld [vmem:[#allocation3 + $0x29] sm:$0xff]
      %s2265 = scalar_lea.vmem %s3, 896
      %v2266 = vld [vmem:[%s2265] sm:$0xff]
      %v2267 = vld [vmem:[%s2265 + $0x8] sm:$0xff]
      %v2268 = vld [vmem:[%s2265 + $0x10] sm:$0xff]
      %v2269 = vld [vmem:[%s2265 + $0x18] sm:$0xff]
      %v2270 = vld [vmem:[%s2265 + $0x20] sm:$0xff]
      %v2271 = vld [vmem:[%s2265 + $0x28] sm:$0xff]
      %v2272 = vld [vmem:[%s2265 + $0x30] sm:$0xff]
      %v2273 = vld [vmem:[%s2265 + $0x38] sm:$0xff]
      %v2274 = vld [vmem:[%s2265 + $0x40] sm:$0xff]
      %v2275 = vld [vmem:[%s2265 + $0x48] sm:$0xff]
      %v2276 = vld [vmem:[%s2265 + $0x50] sm:$0xff]
      %v2277 = vld [vmem:[%s2265 + $0x58] sm:$0xff]
      %v2278 = vld [vmem:[%s2265 + $0x60] sm:$0xff]
      %v2279 = vld [vmem:[%s2265 + $0x68] sm:$0xff]
      %v2280 = vld [vmem:[%s2265 + $0x70] sm:$0xff]
      %v2281 = vld [vmem:[%s2265 + $0x78] sm:$0xff]
      %2282 = vmatprep.subr.mxu0 0.0
      %2283 = vmatpush1.msra.mxu0 %v2281
      %2284 = vmatprep.subr.mxu0 0.0
      %2285 = vmatpush1.msra.mxu0 %v2280
      %2286 = vmatprep.subr.mxu0 0.0
      %2287 = vmatpush1.msra.mxu0 %v2279
      %2288 = vmatprep.subr.mxu0 0.0
      %2289 = vmatpush1.msra.mxu0 %v2278
      %2290 = vmatprep.subr.mxu0 0.0
      %2291 = vmatpush1.msra.mxu0 %v2277
      %2292 = vmatprep.subr.mxu0 0.0
      %2293 = vmatpush1.msra.mxu0 %v2276
      %2294 = vmatprep.subr.mxu0 0.0
      %2295 = vmatpush1.msra.mxu0 %v2275
      %2296 = vmatprep.subr.mxu0 0.0
      %2297 = vmatpush1.msra.mxu0 %v2274
      %2298 = vmatprep.subr.mxu0 0.0
      %2299 = vmatpush1.msra.mxu0 %v2273
      %2300 = vmatprep.subr.mxu0 0.0
      %2301 = vmatpush1.msra.mxu0 %v2272
      %2302 = vmatprep.subr.mxu0 0.0
      %2303 = vmatpush1.msra.mxu0 %v2271
      %2304 = vmatprep.subr.mxu0 0.0
      %2305 = vmatpush1.msra.mxu0 %v2270
      %2306 = vmatprep.subr.mxu0 0.0
      %2307 = vmatpush1.msra.mxu0 %v2269
      %2308 = vmatprep.subr.mxu0 0.0
      %2309 = vmatpush1.msra.mxu0 %v2268
      %2310 = vmatprep.subr.mxu0 0.0
      %2311 = vmatpush1.msra.mxu0 %v2267
      %2312 = vmatprep.subr.mxu0 0.0
      %2313 = vmatpush1.msra.mxu0 %v2266
      %2314 = vmatprep.subr.mxu0 0.0
      %2315 = vmatpush2.msra.mxu0 0.0
      %2316 = vmatprep.subr.mxu0 0.0
      %2317 = vmatpush2.msra.mxu0 0.0
      %2318 = vmatprep.subr.mxu0 0.0
      %2319 = vmatpush2.msra.mxu0 0.0
      %2320 = vmatprep.subr.mxu0 0.0
      %2321 = vmatpush2.msra.mxu0 0.0
      %2322 = vmatprep.subr.mxu0 0.0
      %2323 = vmatpush2.msra.mxu0 0.0
      %2324 = vmatprep.subr.mxu0 0.0
      %2325 = vmatpush2.msra.mxu0 0.0
      %2326 = vmatprep.subr.mxu0 0.0
      %2327 = vmatpush2.msra.mxu0 0.0
      %2328 = vmatprep.subr.mxu0 0.0
      %2329 = vmatpush2.msra.mxu0 0.0
      %2330 = vmatprep.subr.mxu0 0.0
      %2331 = vmatpush2.msra.mxu0 0.0
      %2332 = vmatprep.subr.mxu0 0.0
      %2333 = vmatpush2.msra.mxu0 0.0
      %2334 = vmatprep.subr.mxu0 0.0
      %2335 = vmatpush2.msra.mxu0 0.0
      %2336 = vmatprep.subr.mxu0 0.0
      %2337 = vmatpush2.msra.mxu0 0.0
      %2338 = vmatprep.subr.mxu0 0.0
      %2339 = vmatpush2.msra.mxu0 0.0
      %2340 = vmatprep.subr.mxu0 0.0
      %2341 = vmatpush2.msra.mxu0 0.0
      %2342 = vmatprep.subr.mxu0 0.0
      %2343 = vmatpush2.msra.mxu0 0.0
      %2344 = vmatprep.subr.mxu0 0.0
      %2345 = vmatpush2.msra.mxu0 0.0
      %2346 = vmatprep.mubr.f32.mxu0 0.0
      %2347 = vmatmul.mubr.f32.gmra.mxu0 %v2261
      %v2348 = vpop.f32.mrf.mxu0
      %v2349 = vadd.f32 0.0, %v2348
      %v2350 = vpop.f32.mrf.mxu0
      %2351 = vmatprep.mubr.f32.mxu0 0.0
      %2352 = vmatmul.mubr.f32.gmra.mxu0 %v2262
      %v2353 = vpop.f32.mrf.mxu0
      %v2354 = vadd.f32 0.0, %v2353
      %v2355 = vpop.f32.mrf.mxu0
      %2356 = vmatprep.mubr.f32.mxu0 0.0
      %2357 = vmatmul.mubr.f32.gmra.mxu0 %v2263
      %v2358 = vpop.f32.mrf.mxu0
      %v2359 = vadd.f32 0.0, %v2358
      %v2360 = vpop.f32.mrf.mxu0
      %2361 = vmatprep.mubr.f32.mxu0 0.0
      %2362 = vmatmul.mubr.f32.gmra.mxu0 %v2264
      %v2363 = vpop.f32.mrf.mxu0
      %v2364 = vadd.f32 0.0, %v2363
      %v2365 = vpop.f32.mrf.mxu0
      %2366 = vdwg.mxu0
      %v2367 = vadd.f32 %v2257, %v2349
      %v2368 = vadd.f32 %v2258, %v2354
      %v2369 = vadd.f32 %v2259, %v2359
      %v2370 = vadd.f32 %v2260, %v2364
      %v2371 = vld [vmem:[#allocation3 + $0x12] sm:$0xff]
      %v2372 = vld [vmem:[#allocation3 + $0x1a] sm:$0xff]
      %v2373 = vld [vmem:[#allocation3 + $0x22] sm:$0xff]
      %v2374 = vld [vmem:[#allocation3 + $0x2a] sm:$0xff]
      %s2375 = scalar_lea.vmem %s3, 1024
      %v2376 = vld [vmem:[%s2375] sm:$0xff]
      %v2377 = vld [vmem:[%s2375 + $0x8] sm:$0xff]
      %v2378 = vld [vmem:[%s2375 + $0x10] sm:$0xff]
      %v2379 = vld [vmem:[%s2375 + $0x18] sm:$0xff]
      %v2380 = vld [vmem:[%s2375 + $0x20] sm:$0xff]
      %v2381 = vld [vmem:[%s2375 + $0x28] sm:$0xff]
      %v2382 = vld [vmem:[%s2375 + $0x30] sm:$0xff]
      %v2383 = vld [vmem:[%s2375 + $0x38] sm:$0xff]
      %v2384 = vld [vmem:[%s2375 + $0x40] sm:$0xff]
      %v2385 = vld [vmem:[%s2375 + $0x48] sm:$0xff]
      %v2386 = vld [vmem:[%s2375 + $0x50] sm:$0xff]
      %v2387 = vld [vmem:[%s2375 + $0x58] sm:$0xff]
      %v2388 = vld [vmem:[%s2375 + $0x60] sm:$0xff]
      %v2389 = vld [vmem:[%s2375 + $0x68] sm:$0xff]
      %v2390 = vld [vmem:[%s2375 + $0x70] sm:$0xff]
      %v2391 = vld [vmem:[%s2375 + $0x78] sm:$0xff]
      %2392 = vmatprep.subr.mxu0 0.0
      %2393 = vmatpush1.msra.mxu0 %v2391
      %2394 = vmatprep.subr.mxu0 0.0
      %2395 = vmatpush1.msra.mxu0 %v2390
      %2396 = vmatprep.subr.mxu0 0.0
      %2397 = vmatpush1.msra.mxu0 %v2389
      %2398 = vmatprep.subr.mxu0 0.0
      %2399 = vmatpush1.msra.mxu0 %v2388
      %2400 = vmatprep.subr.mxu0 0.0
      %2401 = vmatpush1.msra.mxu0 %v2387
      %2402 = vmatprep.subr.mxu0 0.0
      %2403 = vmatpush1.msra.mxu0 %v2386
      %2404 = vmatprep.subr.mxu0 0.0
      %2405 = vmatpush1.msra.mxu0 %v2385
      %2406 = vmatprep.subr.mxu0 0.0
      %2407 = vmatpush1.msra.mxu0 %v2384
      %2408 = vmatprep.subr.mxu0 0.0
      %2409 = vmatpush1.msra.mxu0 %v2383
      %2410 = vmatprep.subr.mxu0 0.0
      %2411 = vmatpush1.msra.mxu0 %v2382
      %2412 = vmatprep.subr.mxu0 0.0
      %2413 = vmatpush1.msra.mxu0 %v2381
      %2414 = vmatprep.subr.mxu0 0.0
      %2415 = vmatpush1.msra.mxu0 %v2380
      %2416 = vmatprep.subr.mxu0 0.0
      %2417 = vmatpush1.msra.mxu0 %v2379
      %2418 = vmatprep.subr.mxu0 0.0
      %2419 = vmatpush1.msra.mxu0 %v2378
      %2420 = vmatprep.subr.mxu0 0.0
      %2421 = vmatpush1.msra.mxu0 %v2377
      %2422 = vmatprep.subr.mxu0 0.0
      %2423 = vmatpush1.msra.mxu0 %v2376
      %2424 = vmatprep.subr.mxu0 0.0
      %2425 = vmatpush2.msra.mxu0 0.0
      %2426 = vmatprep.subr.mxu0 0.0
      %2427 = vmatpush2.msra.mxu0 0.0
      %2428 = vmatprep.subr.mxu0 0.0
      %2429 = vmatpush2.msra.mxu0 0.0
      %2430 = vmatprep.subr.mxu0 0.0
      %2431 = vmatpush2.msra.mxu0 0.0
      %2432 = vmatprep.subr.mxu0 0.0
      %2433 = vmatpush2.msra.mxu0 0.0
      %2434 = vmatprep.subr.mxu0 0.0
      %2435 = vmatpush2.msra.mxu0 0.0
      %2436 = vmatprep.subr.mxu0 0.0
      %2437 = vmatpush2.msra.mxu0 0.0
      %2438 = vmatprep.subr.mxu0 0.0
      %2439 = vmatpush2.msra.mxu0 0.0
      %2440 = vmatprep.subr.mxu0 0.0
      %2441 = vmatpush2.msra.mxu0 0.0
      %2442 = vmatprep.subr.mxu0 0.0
      %2443 = vmatpush2.msra.mxu0 0.0
      %2444 = vmatprep.subr.mxu0 0.0
      %2445 = vmatpush2.msra.mxu0 0.0
      %2446 = vmatprep.subr.mxu0 0.0
      %2447 = vmatpush2.msra.mxu0 0.0
      %2448 = vmatprep.subr.mxu0 0.0
      %2449 = vmatpush2.msra.mxu0 0.0
      %2450 = vmatprep.subr.mxu0 0.0
      %2451 = vmatpush2.msra.mxu0 0.0
      %2452 = vmatprep.subr.mxu0 0.0
      %2453 = vmatpush2.msra.mxu0 0.0
      %2454 = vmatprep.subr.mxu0 0.0
      %2455 = vmatpush2.msra.mxu0 0.0
      %2456 = vmatprep.mubr.f32.mxu0 0.0
      %2457 = vmatmul.mubr.f32.gmra.mxu0 %v2371
      %v2458 = vpop.f32.mrf.mxu0
      %v2459 = vadd.f32 0.0, %v2458
      %v2460 = vpop.f32.mrf.mxu0
      %2461 = vmatprep.mubr.f32.mxu0 0.0
      %2462 = vmatmul.mubr.f32.gmra.mxu0 %v2372
      %v2463 = vpop.f32.mrf.mxu0
      %v2464 = vadd.f32 0.0, %v2463
      %v2465 = vpop.f32.mrf.mxu0
      %2466 = vmatprep.mubr.f32.mxu0 0.0
      %2467 = vmatmul.mubr.f32.gmra.mxu0 %v2373
      %v2468 = vpop.f32.mrf.mxu0
      %v2469 = vadd.f32 0.0, %v2468
      %v2470 = vpop.f32.mrf.mxu0
      %2471 = vmatprep.mubr.f32.mxu0 0.0
      %2472 = vmatmul.mubr.f32.gmra.mxu0 %v2374
      %v2473 = vpop.f32.mrf.mxu0
      %v2474 = vadd.f32 0.0, %v2473
      %v2475 = vpop.f32.mrf.mxu0
      %2476 = vdwg.mxu0
      %v2477 = vadd.f32 %v2367, %v2459
      %v2478 = vadd.f32 %v2368, %v2464
      %v2479 = vadd.f32 %v2369, %v2469
      %v2480 = vadd.f32 %v2370, %v2474
      %v2481 = vld [vmem:[%s4] sm:$0x1]
      %v2483 = vlaneseq
      %v2484 = vshrl.u32 %v2483, 7
      %v2485 = vsub.s32 0, %v2484
      %v2486 = vrot.slane %v2481, %v2485
      %v2488 = vadd.f32 %v2477, %v2486
      %v2489 = vadd.f32 %v2478, %v2486
      %v2490 = vadd.f32 %v2479, %v2486
      %v2491 = vadd.f32 %v2480, %v2486
      %v2492 = vmax.f32 %v2488, 0.0
      %v2493 = vmax.f32 %v2489, 0.0
      %v2494 = vmax.f32 %v2490, 0.0
      %v2495 = vmax.f32 %v2491, 0.0
      %2496 = vst [vmem:[%s224] sm:$0xff] %v2492
      %2497 = vst [vmem:[%s224 + $0x8] sm:$0xff] %v2493
      %2498 = vst [vmem:[%s224 + $0x10] sm:$0xff] %v2494
      %2499 = vst [vmem:[%s224 + $0x18] sm:$0xff] %v2495
      %p2500 = scmp.lt.s32.totalorder %s16, 1
      %s2501 = scalar_select %p2500, %s16, 1
      %s2502 = smul.addr %s2501, 4
      %s2503 = smul.addr %s2502, 8
      %s2504 = scalar_lea.vmem %s5, %s2503
      // Predicated region
      $region41: #{downsample_forward.1} parent=39 // pred_check
        %p2505 = pneg %p144
      $region42: #{downsample_forward.1} parent=39 // pred_check_branch
        %2507 = sbr.rel (%p2505) target = $region44
      $region43: #{downsample_forward.1} parent=39 // pred_region
        _
      $region44: #{downsample_forward.1} parent=39 // pred_fallthru
        _
    $region40: #{downsample_forward.1} parent=5 // pred_fallthru
      _
    %p2508 = scmp.le.s32.totalorder 2, %s11
    // Predicated region
    $region45: #{downsample_forward.1} parent=5 // pred_check
      %p2509 = pneg %p2508
    $region46: #{downsample_forward.1} parent=5 // pred_check_branch
      %2511 = sbr.rel (%p2509) target = $region48
    $region47: #{downsample_forward.1} parent=5 // pred_region
      %s2512 = ssub.s32 %s11, 2
      // Predicated region
      $region49: #{downsample_forward.1} parent=47 // pred_check
        %p2513 = pneg %p150
      $region50: #{downsample_forward.1} parent=47 // pred_check_branch
        %2515 = sbr.rel (%p2513) target = $region52
      $region51: #{downsample_forward.1} parent=47 // pred_region
        %p2516 = scmp.lt.s32.totalorder %s17, 1
        %s2517 = scalar_select %p2516, %s17, 1
        %s2518 = smul.addr %s2517, 4
        %s2519 = smul.addr %s2518, 8
        %s2520 = scalar_lea.vmem %s5, %s2519
      $region52: #{downsample_forward.1} parent=47 // pred_fallthru
        _
    $region48: #{downsample_forward.1} parent=5 // pred_fallthru
      _
  $region6: #{downsample_forward.1} parent=0 // loop_footer
    %s15 = sadd.s32 1, %s11
  $region7: #{downsample_forward.1} parent=0 // loop_footer_branch
    %10 = sbr.rel target = $region3
  $region8: #{downsample_forward.1} parent=0 // loop_exit
    _

</llo_original>
